<compile_context>
chip_gen: v7x
topology: tpu7x:2x2x1
jax: 0.10.0
libtpu: 0.0.40
codegen_flags: <defaults>
</compile_context>

<pallas_src>
import math
import functools

import jax
import jax.numpy as jnp
from jax.experimental import pallas as pl
from jax.experimental.pallas import tpu as pltpu

BN_EPS = 1e-5
_VMEM_LIMIT = 48 * 1024 * 1024  # safe on v5e/v6e (128 MiB) and v7x (64 MiB)


def _round_up(x, m):
    return ((x + m - 1) // m) * m


# ----------------------------------------------------------------------------
# Pallas kernels
# ----------------------------------------------------------------------------
def _conv1_ds_kernel(p_ref, w1_ref, wds_ref, o1_ref, ods_ref):
    """Shared-input fused kernel: conv1+bn1+relu and downsample-conv+bn."""
    p = p_ref[...]                                            # (tm, K1) bf16
    o1 = jnp.dot(p, w1_ref[...], preferred_element_type=jnp.float32)
    o1_ref[...] = jnp.maximum(o1, 0.0).astype(o1_ref.dtype)   # bn folded in w
    ods = jnp.dot(p, wds_ref[...], preferred_element_type=jnp.float32)
    ods_ref[...] = ods.astype(ods_ref.dtype)                  # no relu


def _conv23_kernel(p2_ref, w2_ref, w3_ref, r_ref, o_ref):
    """Fused conv2(3x3)+bn2+relu -> conv3(1x1)+bn3 + residual + relu.
    The conv2 intermediate stays in VMEM/vregs (never written to HBM)."""
    h = jnp.dot(p2_ref[...], w2_ref[...], preferred_element_type=jnp.float32)
    h = jnp.maximum(h, 0.0).astype(jnp.bfloat16)              # feed MXU in bf16
    out = jnp.dot(h, w3_ref[...], preferred_element_type=jnp.float32)
    out = jnp.maximum(out + r_ref[...], 0.0)                  # residual + relu (f32)
    o_ref[...] = out.astype(o_ref.dtype)


def _compiler_params():
    return pltpu.CompilerParams(
        dimension_semantics=("parallel",),
        vmem_limit_bytes=_VMEM_LIMIT,
    )


def conv1_ds_call(patches1, w1, wds, tm):
    """patches1: (Mp, K1) bf16; w1: (K1, Np) bf16; wds: (K1, Nd) bf16."""
    Mp, K1 = patches1.shape
    Np = w1.shape[1]
    Nd = wds.shape[1]
    return pl.pallas_call(
        _conv1_ds_kernel,
        out_shape=(jax.ShapeDtypeStruct((Mp, Np), jnp.bfloat16),
                   jax.ShapeDtypeStruct((Mp, Nd), jnp.float32)),
        grid=(Mp // tm,),
        in_specs=[
            pl.BlockSpec((tm, K1), lambda i: (i, 0)),
            pl.BlockSpec((K1, Np), lambda i: (0, 0)),   # resident across grid
            pl.BlockSpec((K1, Nd), lambda i: (0, 0)),
        ],
        out_specs=(
            pl.BlockSpec((tm, Np), lambda i: (i, 0)),
            pl.BlockSpec((tm, Nd), lambda i: (i, 0)),
        ),
        compiler_params=_compiler_params(),
    )(patches1, w1, wds)


def conv23_call(patches2, w2, w3, residual, tm):
    """patches2: (Mp, K2) bf16; w2: (K2, Np) bf16; w3: (Np, Nd) bf16;
    residual: (Mp, Nd) f32."""
    Mp, K2 = patches2.shape
    Np = w2.shape[1]
    Nd = w3.shape[1]
    return pl.pallas_call(
        _conv23_kernel,
        out_shape=jax.ShapeDtypeStruct((Mp, Nd), jnp.float32),
        grid=(Mp // tm,),
        in_specs=[
            pl.BlockSpec((tm, K2), lambda i: (i, 0)),
            pl.BlockSpec((K2, Np), lambda i: (0, 0)),
            pl.BlockSpec((Np, Nd), lambda i: (0, 0)),
            pl.BlockSpec((tm, Nd), lambda i: (i, 0)),
        ],
        out_specs=pl.BlockSpec((tm, Nd), lambda i: (i, 0)),
        compiler_params=_compiler_params(),
    )(patches2, w2, w3, residual)


# ----------------------------------------------------------------------------
# im2col / weight-folding glue (plain JAX reshapes & pads — no heavy compute)
# ----------------------------------------------------------------------------
def im2col_2x2_s2(x_nhwc):
    """(N,H,W,C) -> (N*H/2*W/2, 4*C), patch flattened as (kh, kw, c)."""
    N, H, W, C = x_nhwc.shape
    Ho, Wo = H // 2, W // 2
    p = x_nhwc.reshape(N, Ho, 2, Wo, 2, C).transpose(0, 1, 3, 2, 4, 5)
    return p.reshape(N * Ho * Wo, 4 * C)


def im2col_3x3_s1_p1(x_nhwc):
    """(N,H,W,C) -> (N*H*W, 9*C), patch flattened as (kh, kw, c)."""
    N, H, W, C = x_nhwc.shape
    xp = jnp.pad(x_nhwc, ((0, 0), (1, 1), (1, 1), (0, 0)))
    patches = [xp[:, kh:kh + H, kw:kw + W, :] for kh in range(3) for kw in range(3)]
    return jnp.concatenate(patches, axis=-1).reshape(N * H * W, 9 * C)


def w_to_mat(w_oihw, bn_scale, cin_pad, cout_pad):
    """PyTorch (Cout, Cin, kh, kw) -> (kh*kw*cin_pad, cout_pad) bf16 with the
    BatchNorm scale folded into the output columns; zero-padded to lane-dense
    channel counts (padded rows/cols are exactly zero)."""
    Cout, Cin, kh, kw = w_oihw.shape
    w = w_oihw * bn_scale[:, None, None, None]           # fold BN (f32)
    w = jnp.transpose(w, (2, 3, 1, 0))                   # (kh, kw, Cin, Cout)
    w = jnp.pad(w, ((0, 0), (0, 0), (0, cin_pad - Cin), (0, cout_pad - Cout)))
    return w.reshape(kh * kw * cin_pad, cout_pad).astype(jnp.bfloat16)


# ----------------------------------------------------------------------------
# Module: parameters + forward
# ----------------------------------------------------------------------------
def init_params(key, inplanes, planes):
    def conv_w(k, cout, cin, ksz):
        std = math.sqrt(2.0 / (ksz * ksz * cout))        # weight_init() semantics
        return std * jax.random.normal(k, (cout, cin, ksz, ksz), dtype=jnp.float32)

    k1, k2, k3, k4 = jax.random.split(key, 4)
    params = {
        "conv1": conv_w(k1, planes, inplanes, 2),
        "conv2": conv_w(k2, planes, planes, 3),
        "conv3": conv_w(k3, planes * 4, planes, 1),
        "conv_ds": conv_w(k4, planes * 4, inplanes, 2),
    }
    # Eval-mode BN with fresh stats: scale = gamma/sqrt(var+eps) = 1/sqrt(1+eps),
    # effective bias = beta - mean*scale = 0 (so bias is dropped in the kernel).
    bn_s = 1.0 / math.sqrt(1.0 + BN_EPS)
    for name, c in (("bn1", planes), ("bn2", planes), ("bn3", planes * 4),
                    ("bn_ds", planes * 4)):
        params[name + "_scale"] = jnp.full((c,), bn_s, dtype=jnp.float32)
        params[name + "_bias"] = jnp.zeros((c,), dtype=jnp.float32)  # kept; always 0
    return params


def extra_bottleneck1_forward(params, x_nchw, tm=256):
    """x_nchw: (N, inplanes, H, W) f32, H and W even.
    Returns (N, 4*planes, H/2, W/2) f32 (NCHW, matching the PyTorch module)."""
    N, Cin, H, W = x_nchw.shape
    Ho, Wo = H // 2, W // 2
    planes = params["conv1"].shape[0]

    # Lane-dense (multiple-of-128) channel counts for unmasked vector stores.
    Np = _round_up(planes, 128)          # conv1 / conv2 output channels (padded)
    Nd = _round_up(4 * planes, 128)      # conv3 / downsample output channels

    M = N * Ho * Wo
    tm_eff = min(tm, _round_up(max(M, 8), 8))   # big row tiles, sublane-aligned
    Mp = _round_up(M, tm_eff)

    # NHWC internally (the NCHW<->NHWC transposes only exist to honour the
    # PyTorch calling convention; keep NHWC end-to-end if the caller allows).
    x = jnp.transpose(x_nchw, (0, 2, 3, 1)).astype(jnp.float32)

    # Folded + padded bf16 weight matrices (BN scale folded into columns).
    w1 = w_to_mat(params["conv1"], params["bn1_scale"], Cin, Np)
    wds = w_to_mat(params["conv_ds"], params["bn_ds_scale"], Cin, Nd)
    w2 = w_to_mat(params["conv2"], params["bn2_scale"], Np, Np)
    w3 = w_to_mat(params["conv3"], params["bn3_scale"], Np, Nd)

    # ---- stage A: conv1+bn1+relu  &  downsample conv+bn (shared patches) ---
    patches1 = im2col_2x2_s2(x).astype(jnp.bfloat16)          # (M, 4*Cin)
    if Mp != M:
        patches1 = jnp.pad(patches1, ((0, Mp - M), (0, 0)))
    out1, residual = conv1_ds_call(patches1, w1, wds, tm_eff)  # bf16 (Mp,Np), f32 (Mp,Nd)

    # ---- stage B: conv2(3x3)+bn2+relu + conv3(1x1)+bn3 + residual + relu ---
    out1_nhwc = out1[:M].reshape(N, Ho, Wo, Np)
    patches2 = im2col_3x3_s1_p1(out1_nhwc)                    # bf16 (M, 9*Np)
    if Mp != M:
        patches2 = jnp.pad(patches2, ((0, Mp - M), (0, 0)))
    out = conv23_call(patches2, w2, w3, residual, tm_eff)     # f32 (Mp, Nd)

    out = out[:M, :4 * planes].reshape(N, Ho, Wo, 4 * planes)
    return jnp.transpose(out, (0, 3, 1, 2))                   # back to NCHW


# ----------------------------------------------------------------------------
# References for the sanity check
# ----------------------------------------------------------------------------
def _ref_conv(x, w, stride, pad, **kw):
    return jax.lax.conv_general_dilated(
        x, w, (stride, stride), [(pad, pad), (pad, pad)],
        dimension_numbers=("NCHW", "OIHW", "NCHW"), **kw)


def _ref_bn(x, scale, bias):
    return x * scale[None, :, None, None] + bias[None, :, None, None]


def reference_forward(params, x):
    """Pure f32 reference (exact PyTorch-module semantics, eval-mode BN)."""
    out = jax.nn.relu(_ref_bn(_ref_conv(x, params["conv1"], 2, 0),
                              params["bn1_scale"], params["bn1_bias"]))
    out = jax.nn.relu(_ref_bn(_ref_conv(out, params["conv2"], 1, 1),
                              params["bn2_scale"], params["bn2_bias"]))
    out = _ref_bn(_ref_conv(out, params["conv3"], 1, 0),
                  params["bn3_scale"], params["bn3_bias"])
    residual = _ref_bn(_ref_conv(x, params["conv_ds"], 2, 0),
                       params["bn_ds_scale"], params["bn_ds_bias"])
    return jax.nn.relu(out + residual)


def reference_forward_bf16(params, x):
    """Reference that mirrors the kernel's numerics exactly:
    bf16 conv operands (BN folded into weights before the cast), f32 accum."""
    def convf(inp, w, scale, stride, pad):
        wf = (w * scale[:, None, None, None]).astype(jnp.bfloat16)
        return _ref_conv(inp.astype(jnp.bfloat16), wf, stride, pad,
                         preferred_element_type=jnp.float32)

    out1 = jax.nn.relu(convf(x, params["conv1"], params["bn1_scale"], 2, 0))
    res = convf(x, params["conv_ds"], params["bn_ds_scale"], 2, 0)
    out2 = jax.nn.relu(convf(out1, params["conv2"], params["bn2_scale"], 1, 1))
    out3 = convf(out2, params["conv3"], params["bn3_scale"], 1, 0)
    return jax.nn.relu(out3 + res)


# ----------------------------------------------------------------------------
if __name__ == "__main__":
    # Small shapes consistent with the module (inplanes -> planes -> 4*planes).
    N, inplanes, planes, H, W = 2, 64, 32, 16, 16

    key = jax.random.PRNGKey(0)
    kx, kp = jax.random.split(key)
    x = jax.random.normal(kx, (N, inplanes, H, W), dtype=jnp.float32)
    params = init_params(kp, inplanes, planes)

    fwd = jax.jit(functools.partial(extra_bottleneck1_forward, tm=256))
    y = jax.block_until_ready(fwd(params, x))
    assert y.shape == (N, 4 * planes, H // 2, W // 2), y.shape

    # Tight check against a reference with identical bf16-operand numerics.
    y_ref_bf16 = jax.block_until_ready(reference_forward_bf16(params, x))
    max_diff = float(jnp.max(jnp.abs(y - y_ref_bf16)))
    assert jnp.allclose(y, y_ref_bf16, atol=5e-3, rtol=5e-3), max_diff

    # Loose check against the pure-f32 reference (bf16 MXU operands only).
    y_ref = jax.block_until_ready(reference_forward(params, x))
    rel = float(jnp.linalg.norm(y - y_ref) / (jnp.linalg.norm(y_ref) + 1e-12))
    assert rel < 5e-2, rel

    print("KERNEL_OK")
</pallas_src>

<mosaic_0001>
module attributes {stable_mosaic.version = 11 : i64} {
  func.func @_conv1_ds_kernel(%arg0: i32, %arg1: memref<128x256xbf16, #tpu.memory_space<vmem>>, %arg2: memref<256x128xbf16, #tpu.memory_space<vmem>>, %arg3: memref<256x128xbf16, #tpu.memory_space<vmem>>, %arg4: memref<128x128xbf16, #tpu.memory_space<vmem>>, %arg5: memref<128x128xf32, #tpu.memory_space<vmem>>) attributes {dimension_semantics = [#tpu.dimension_semantics<parallel>], iteration_bounds = array<i64: 1>, scalar_prefetch = 0 : i64, scratch_operands = 0 : i64, tpu.core_type = #tpu.core_type<tc>, window_params = [{transform_indices = @transform_0, window_bounds = array<i64: 128, 256>}, {pipeline_mode = #tpu.pipeline_mode<synchronous>, transform_indices = @transform_1, window_bounds = array<i64: 256, 128>}, {pipeline_mode = #tpu.pipeline_mode<synchronous>, transform_indices = @transform_2, window_bounds = array<i64: 256, 128>}, {transform_indices = @transform_3, window_bounds = array<i64: 128, 128>}, {transform_indices = @transform_4, window_bounds = array<i64: 128, 128>}]} {
    %c0 = arith.constant 0 : index
    %c0_0 = arith.constant 0 : index
    %0 = vector.load %arg1[%c0, %c0_0] : memref<128x256xbf16, #tpu.memory_space<vmem>>, vector<128x256xbf16>
    %c0_1 = arith.constant 0 : index
    %c0_2 = arith.constant 0 : index
    %1 = vector.load %arg2[%c0_1, %c0_2] : memref<256x128xbf16, #tpu.memory_space<vmem>>, vector<256x128xbf16>
    %cst = arith.constant dense<0.000000e+00> : vector<128x128xf32>
    %2 = tpu.matmul %0, %1, %cst {dimension_numbers = #tpu.dot_dimension_numbers<[1], [0], [0], [1], [0, 0, 1, 1], [], []>} : vector<128x256xbf16>, vector<256x128xbf16>, vector<128x128xf32> -> vector<128x128xf32>
    %cst_3 = arith.constant 0.000000e+00 : f32
    %3 = vector.broadcast %cst_3 : f32 to vector<128x128xf32>
    %4 = arith.maximumf %2, %3 : vector<128x128xf32>
    %5 = arith.truncf %4 : vector<128x128xf32> to vector<128x128xbf16>
    %c0_4 = arith.constant 0 : index
    %c0_5 = arith.constant 0 : index
    %6 = vector.load %arg4[%c0_4, %c0_5] : memref<128x128xbf16, #tpu.memory_space<vmem>>, vector<128x128xbf16>
    tpu.vector_store %arg4[%c0_4, %c0_5], %5 {strides = array<i32>} : memref<128x128xbf16, #tpu.memory_space<vmem>>, vector<128x128xbf16>,
    %c0_6 = arith.constant 0 : index
    %c0_7 = arith.constant 0 : index
    %7 = vector.load %arg3[%c0_6, %c0_7] : memref<256x128xbf16, #tpu.memory_space<vmem>>, vector<256x128xbf16>
    %cst_8 = arith.constant dense<0.000000e+00> : vector<128x128xf32>
    %8 = tpu.matmul %0, %7, %cst_8 {dimension_numbers = #tpu.dot_dimension_numbers<[1], [0], [0], [1], [0, 0, 1, 1], [], []>} : vector<128x256xbf16>, vector<256x128xbf16>, vector<128x128xf32> -> vector<128x128xf32>
    %c0_9 = arith.constant 0 : index
    %c0_10 = arith.constant 0 : index
    %9 = vector.load %arg5[%c0_9, %c0_10] : memref<128x128xf32, #tpu.memory_space<vmem>>, vector<128x128xf32>
    tpu.vector_store %arg5[%c0_9, %c0_10], %8 {strides = array<i32>} : memref<128x128xf32, #tpu.memory_space<vmem>>, vector<128x128xf32>,
    return
  }
  func.func @transform_0(%arg0: i32) -> (i32, i32) {
    %c0_i32 = arith.constant 0 : i32
    %c0_i32_0 = arith.constant 0 : i32
    return %arg0, %c0_i32 : i32, i32
  }
  func.func @transform_1(%arg0: i32) -> (i32, i32) {
    %c0_i32 = arith.constant 0 : i32
    %c0_i32_0 = arith.constant 0 : i32
    %c0_i32_1 = arith.constant 0 : i32
    return %c0_i32, %c0_i32_0 : i32, i32
  }
  func.func @transform_2(%arg0: i32) -> (i32, i32) {
    %c0_i32 = arith.constant 0 : i32
    %c0_i32_0 = arith.constant 0 : i32
    %c0_i32_1 = arith.constant 0 : i32
    return %c0_i32, %c0_i32_0 : i32, i32
  }
  func.func @transform_3(%arg0: i32) -> (i32, i32) {
    %c0_i32 = arith.constant 0 : i32
    %c0_i32_0 = arith.constant 0 : i32
    return %arg0, %c0_i32 : i32, i32
  }
  func.func @transform_4(%arg0: i32) -> (i32, i32) {
    %c0_i32 = arith.constant 0 : i32
    %c0_i32_0 = arith.constant 0 : i32
    return %arg0, %c0_i32 : i32, i32
  }
}

module attributes {stable_mosaic.version = 11 : i64} {
  func.func @_conv23_kernel(%arg0: i32, %arg1: memref<128x1152xbf16, #tpu.memory_space<vmem>>, %arg2: memref<1152x128xbf16, #tpu.memory_space<vmem>>, %arg3: memref<128x128xbf16, #tpu.memory_space<vmem>>, %arg4: memref<128x128xf32, #tpu.memory_space<vmem>>, %arg5: memref<128x128xf32, #tpu.memory_space<vmem>>) attributes {dimension_semantics = [#tpu.dimension_semantics<parallel>], iteration_bounds = array<i64: 1>, scalar_prefetch = 0 : i64, scratch_operands = 0 : i64, tpu.core_type = #tpu.core_type<tc>, window_params = [{transform_indices = @transform_0, window_bounds = array<i64: 128, 1152>}, {pipeline_mode = #tpu.pipeline_mode<synchronous>, transform_indices = @transform_1, window_bounds = array<i64: 1152, 128>}, {pipeline_mode = #tpu.pipeline_mode<synchronous>, transform_indices = @transform_2, window_bounds = array<i64: 128, 128>}, {transform_indices = @transform_3, window_bounds = array<i64: 128, 128>}, {transform_indices = @transform_4, window_bounds = array<i64: 128, 128>}]} {
    %c0 = arith.constant 0 : index
    %c0_0 = arith.constant 0 : index
    %0 = vector.load %arg1[%c0, %c0_0] : memref<128x1152xbf16, #tpu.memory_space<vmem>>, vector<128x1152xbf16>
    %c0_1 = arith.constant 0 : index
    %c0_2 = arith.constant 0 : index
    %1 = vector.load %arg2[%c0_1, %c0_2] : memref<1152x128xbf16, #tpu.memory_space<vmem>>, vector<1152x128xbf16>
    %cst = arith.constant dense<0.000000e+00> : vector<128x128xf32>
    %2 = tpu.matmul %0, %1, %cst {dimension_numbers = #tpu.dot_dimension_numbers<[1], [0], [0], [1], [0, 0, 1, 1], [], []>} : vector<128x1152xbf16>, vector<1152x128xbf16>, vector<128x128xf32> -> vector<128x128xf32>
    %cst_3 = arith.constant 0.000000e+00 : f32
    %3 = vector.broadcast %cst_3 : f32 to vector<128x128xf32>
    %4 = arith.maximumf %2, %3 : vector<128x128xf32>
    %5 = arith.truncf %4 : vector<128x128xf32> to vector<128x128xbf16>
    %c0_4 = arith.constant 0 : index
    %c0_5 = arith.constant 0 : index
    %6 = vector.load %arg3[%c0_4, %c0_5] : memref<128x128xbf16, #tpu.memory_space<vmem>>, vector<128x128xbf16>
    %cst_6 = arith.constant dense<0.000000e+00> : vector<128x128xf32>
    %7 = tpu.matmul %5, %6, %cst_6 {dimension_numbers = #tpu.dot_dimension_numbers<[1], [0], [0], [1], [0, 0, 1, 1], [], []>} : vector<128x128xbf16>, vector<128x128xbf16>, vector<128x128xf32> -> vector<128x128xf32>
    %c0_7 = arith.constant 0 : index
    %c0_8 = arith.constant 0 : index
    %8 = vector.load %arg4[%c0_7, %c0_8] : memref<128x128xf32, #tpu.memory_space<vmem>>, vector<128x128xf32>
    %9 = arith.addf %7, %8 : vector<128x128xf32>
    %cst_9 = arith.constant 0.000000e+00 : f32
    %10 = vector.broadcast %cst_9 : f32 to vector<128x128xf32>
    %11 = arith.maximumf %9, %10 : vector<128x128xf32>
    %c0_10 = arith.constant 0 : index
    %c0_11 = arith.constant 0 : index
    %12 = vector.load %arg5[%c0_10, %c0_11] : memref<128x128xf32, #tpu.memory_space<vmem>>, vector<128x128xf32>
    tpu.vector_store %arg5[%c0_10, %c0_11], %11 {strides = array<i32>} : memref<128x128xf32, #tpu.memory_space<vmem>>, vector<128x128xf32>,
    return
  }
  func.func @transform_0(%arg0: i32) -> (i32, i32) {
    %c0_i32 = arith.constant 0 : i32
    %c0_i32_0 = arith.constant 0 : i32
    return %arg0, %c0_i32 : i32, i32
  }
  func.func @transform_1(%arg0: i32) -> (i32, i32) {
    %c0_i32 = arith.constant 0 : i32
    %c0_i32_0 = arith.constant 0 : i32
    %c0_i32_1 = arith.constant 0 : i32
    return %c0_i32, %c0_i32_0 : i32, i32
  }
  func.func @transform_2(%arg0: i32) -> (i32, i32) {
    %c0_i32 = arith.constant 0 : i32
    %c0_i32_0 = arith.constant 0 : i32
    %c0_i32_1 = arith.constant 0 : i32
    return %c0_i32, %c0_i32_0 : i32, i32
  }
  func.func @transform_3(%arg0: i32) -> (i32, i32) {
    %c0_i32 = arith.constant 0 : i32
    %c0_i32_0 = arith.constant 0 : i32
    return %arg0, %c0_i32 : i32, i32
  }
  func.func @transform_4(%arg0: i32) -> (i32, i32) {
    %c0_i32 = arith.constant 0 : i32
    %c0_i32_0 = arith.constant 0 : i32
    return %arg0, %c0_i32 : i32, i32
  }
}

</mosaic_0001>

<llo_original>
// kernel: extra_bottleneck1_forward.2
$region0: #{extra_bottleneck1_forward.2}
  #allocation0 [shape = 'u32[]', space=smem, size = 0x4, offset = 0x4, fixed_abs, tag = 'smem constant byte address 0x4 - core index']
  #allocation1 [shape = 'u32[144,128]{1,0:T(1,128)}', space=vmem, size = 0x12000, scoped, tag = 'internal scratch']
  %s0 = inlined_call_operand.vmem [shape: bf16[128,256], index: 0, kind: input, shape index: {}]
  %s1 = inlined_call_operand.vmem [shape: bf16[256,128], index: 1, kind: input, shape index: {}]
  %s2 = inlined_call_operand.vmem [shape: bf16[256,128], index: 2, kind: input, shape index: {}]
  %s3 = inlined_call_operand.vmem [shape: bf16[128,128], index: 3, kind: output, shape index: {0}]
  %s4 = inlined_call_operand.vmem [shape: f32[128,128], index: 4, kind: output, shape index: {1}]
  %5 = xla_tuple %s3, %s4
  %s6 = sld [smem:[#allocation0]]
  $region30: #{extra_bottleneck1_forward.2} parent=0
    _
  %s8 = ssub.s32 1, %s6
  %s9 = scalar_select 0, %s8, %s6
  // Predicated region
  $region2: #{extra_bottleneck1_forward.2} parent=0 // pred_check
    _
  $region3: #{extra_bottleneck1_forward.2} parent=0 // pred_check_branch
    %11 = sbr.rel (0) target = $region5
  $region4: #{extra_bottleneck1_forward.2} parent=0 // pred_region
    _
  $region5: #{extra_bottleneck1_forward.2} parent=0 // pred_fallthru
    _
  // Predicated region
  $region6: #{extra_bottleneck1_forward.2} parent=0 // pred_check
    _
  $region7: #{extra_bottleneck1_forward.2} parent=0 // pred_check_branch
    %13 = sbr.rel (0) target = $region9
  $region8: #{extra_bottleneck1_forward.2} parent=0 // pred_region
    _
  $region9: #{extra_bottleneck1_forward.2} parent=0 // pred_fallthru
    _
  // Predicated region
  $region10: #{extra_bottleneck1_forward.2} parent=0 // pred_check
    _
  $region11: #{extra_bottleneck1_forward.2} parent=0 // pred_check_branch
    %15 = sbr.rel (0) target = $region13
  $region12: #{extra_bottleneck1_forward.2} parent=0 // pred_region
    _
  $region13: #{extra_bottleneck1_forward.2} parent=0 // pred_fallthru
    _
  %v17 = vld [vmem:[%s0] sm:$0xff]
  %v18 = vld [vmem:[%s0 + $0x8] sm:$0xff]
  %v19 = vld [vmem:[%s0 + $0x10] sm:$0xff]
  %v20 = vld [vmem:[%s0 + $0x18] sm:$0xff]
  %v21 = vld [vmem:[%s0 + $0x20] sm:$0xff]
  %v22 = vld [vmem:[%s0 + $0x28] sm:$0xff]
  %v23 = vld [vmem:[%s0 + $0x30] sm:$0xff]
  %v24 = vld [vmem:[%s0 + $0x38] sm:$0xff]
  %v25 = vld [vmem:[%s0 + $0x40] sm:$0xff]
  %v26 = vld [vmem:[%s0 + $0x48] sm:$0xff]
  %v27 = vld [vmem:[%s0 + $0x50] sm:$0xff]
  %v28 = vld [vmem:[%s0 + $0x58] sm:$0xff]
  %v29 = vld [vmem:[%s0 + $0x60] sm:$0xff]
  %v30 = vld [vmem:[%s0 + $0x68] sm:$0xff]
  %v31 = vld [vmem:[%s0 + $0x70] sm:$0xff]
  %v32 = vld [vmem:[%s0 + $0x78] sm:$0xff]
  %v33 = vld [vmem:[%s1] sm:$0xf]
  %v34 = vld [vmem:[%s1 + $0x4] sm:$0xf]
  %v35 = vld [vmem:[%s1 + $0x8] sm:$0xf]
  %v36 = vld [vmem:[%s1 + $0xc] sm:$0xf]
  %v37 = vld [vmem:[%s1 + $0x10] sm:$0xf]
  %v38 = vld [vmem:[%s1 + $0x14] sm:$0xf]
  %v39 = vld [vmem:[%s1 + $0x18] sm:$0xf]
  %v40 = vld [vmem:[%s1 + $0x1c] sm:$0xf]
  %v41 = vld [vmem:[%s1 + $0x20] sm:$0xf]
  %v42 = vld [vmem:[%s1 + $0x24] sm:$0xf]
  %v43 = vld [vmem:[%s1 + $0x28] sm:$0xf]
  %v44 = vld [vmem:[%s1 + $0x2c] sm:$0xf]
  %v45 = vld [vmem:[%s1 + $0x30] sm:$0xf]
  %v46 = vld [vmem:[%s1 + $0x34] sm:$0xf]
  %v47 = vld [vmem:[%s1 + $0x38] sm:$0xf]
  %v48 = vld [vmem:[%s1 + $0x3c] sm:$0xf]
  %v49 = vld [vmem:[%s1 + $0x40] sm:$0xf]
  %v50 = vld [vmem:[%s1 + $0x44] sm:$0xf]
  %v51 = vld [vmem:[%s1 + $0x48] sm:$0xf]
  %v52 = vld [vmem:[%s1 + $0x4c] sm:$0xf]
  %v53 = vld [vmem:[%s1 + $0x50] sm:$0xf]
  %v54 = vld [vmem:[%s1 + $0x54] sm:$0xf]
  %v55 = vld [vmem:[%s1 + $0x58] sm:$0xf]
  %v56 = vld [vmem:[%s1 + $0x5c] sm:$0xf]
  %v57 = vld [vmem:[%s1 + $0x60] sm:$0xf]
  %v58 = vld [vmem:[%s1 + $0x64] sm:$0xf]
  %v59 = vld [vmem:[%s1 + $0x68] sm:$0xf]
  %v60 = vld [vmem:[%s1 + $0x6c] sm:$0xf]
  %v61 = vld [vmem:[%s1 + $0x70] sm:$0xf]
  %v62 = vld [vmem:[%s1 + $0x74] sm:$0xf]
  %v63 = vld [vmem:[%s1 + $0x78] sm:$0xf]
  %v64 = vld [vmem:[%s1 + $0x7c] sm:$0xf]
  %v81 = vunpack.c.l.b16 %v17
  %v82 = vunpack.c.h.b16 %v17
  %v83 = vunpack.c.l.b16 %v18
  %v84 = vunpack.c.h.b16 %v18
  %v85 = vunpack.c.l.b16 %v19
  %v86 = vunpack.c.h.b16 %v19
  %v87 = vunpack.c.l.b16 %v20
  %v88 = vunpack.c.h.b16 %v20
  %v89 = vunpack.c.l.b16 %v21
  %v90 = vunpack.c.h.b16 %v21
  %v91 = vunpack.c.l.b16 %v22
  %v92 = vunpack.c.h.b16 %v22
  %v93 = vunpack.c.l.b16 %v23
  %v94 = vunpack.c.h.b16 %v23
  %v95 = vunpack.c.l.b16 %v24
  %v96 = vunpack.c.h.b16 %v24
  %v97 = vunpack.c.l.b16 %v25
  %v98 = vunpack.c.h.b16 %v25
  %v99 = vunpack.c.l.b16 %v26
  %v100 = vunpack.c.h.b16 %v26
  %v101 = vunpack.c.l.b16 %v27
  %v102 = vunpack.c.h.b16 %v27
  %v103 = vunpack.c.l.b16 %v28
  %v104 = vunpack.c.h.b16 %v28
  %v105 = vunpack.c.l.b16 %v29
  %v106 = vunpack.c.h.b16 %v29
  %v107 = vunpack.c.l.b16 %v30
  %v108 = vunpack.c.h.b16 %v30
  %v109 = vunpack.c.l.b16 %v31
  %v110 = vunpack.c.h.b16 %v31
  %v111 = vunpack.c.l.b16 %v32
  %v112 = vunpack.c.h.b16 %v32
  %v113 = vpack.c.b16 %v83, %v81
  %v114 = vpack.c.b16 %v84, %v82
  %v115 = vpack.c.b16 %v87, %v85
  %v116 = vpack.c.b16 %v88, %v86
  %v117 = vpack.c.b16 %v91, %v89
  %v118 = vpack.c.b16 %v92, %v90
  %v119 = vpack.c.b16 %v95, %v93
  %v120 = vpack.c.b16 %v96, %v94
  %v121 = vpack.c.b16 %v99, %v97
  %v122 = vpack.c.b16 %v100, %v98
  %v123 = vpack.c.b16 %v103, %v101
  %v124 = vpack.c.b16 %v104, %v102
  %v125 = vpack.c.b16 %v107, %v105
  %v126 = vpack.c.b16 %v108, %v106
  %v127 = vpack.c.b16 %v111, %v109
  %v128 = vpack.c.b16 %v112, %v110
  %v177 = vunpack.c.l.b16 %v33
  %v178 = vunpack.c.l.b16 %v34
  %v179 = vunpack.c.l.b16 %v35
  %v180 = vunpack.c.l.b16 %v36
  %v181 = vunpack.c.l.b16 %v37
  %v182 = vunpack.c.l.b16 %v38
  %v183 = vunpack.c.l.b16 %v39
  %v184 = vunpack.c.l.b16 %v40
  %v185 = vunpack.c.l.b16 %v41
  %v186 = vunpack.c.l.b16 %v42
  %v187 = vunpack.c.l.b16 %v43
  %v188 = vunpack.c.l.b16 %v44
  %v189 = vunpack.c.l.b16 %v45
  %v190 = vunpack.c.l.b16 %v46
  %v191 = vunpack.c.l.b16 %v47
  %v192 = vunpack.c.l.b16 %v48
  %v193 = vunpack.c.l.b16 %v49
  %v194 = vunpack.c.l.b16 %v50
  %v195 = vunpack.c.l.b16 %v51
  %v196 = vunpack.c.l.b16 %v52
  %v197 = vunpack.c.l.b16 %v53
  %v198 = vunpack.c.l.b16 %v54
  %v199 = vunpack.c.l.b16 %v55
  %v200 = vunpack.c.l.b16 %v56
  %v201 = vunpack.c.l.b16 %v57
  %v202 = vunpack.c.l.b16 %v58
  %v203 = vunpack.c.l.b16 %v59
  %v204 = vunpack.c.l.b16 %v60
  %v205 = vunpack.c.l.b16 %v61
  %v206 = vunpack.c.l.b16 %v62
  %v207 = vunpack.c.l.b16 %v63
  %v208 = vunpack.c.l.b16 %v64
  %v209 = vpack.c.b16 %v178, %v177
  %v210 = vpack.c.b16 %v180, %v179
  %v211 = vpack.c.b16 %v182, %v181
  %v212 = vpack.c.b16 %v184, %v183
  %v213 = vpack.c.b16 %v186, %v185
  %v214 = vpack.c.b16 %v188, %v187
  %v215 = vpack.c.b16 %v190, %v189
  %v216 = vpack.c.b16 %v192, %v191
  %v217 = vpack.c.b16 %v194, %v193
  %v218 = vpack.c.b16 %v196, %v195
  %v219 = vpack.c.b16 %v198, %v197
  %v220 = vpack.c.b16 %v200, %v199
  %v221 = vpack.c.b16 %v202, %v201
  %v222 = vpack.c.b16 %v204, %v203
  %v223 = vpack.c.b16 %v206, %v205
  %v224 = vpack.c.b16 %v208, %v207
  %241 = vmatprep.subr.bf16.mxu0 0
  %242 = vmatpush1.bf16.msra.mxu0 %v209
  %243 = vmatprep.subr.bf16.mxu0 0
  %244 = vmatpush1.bf16.msra.mxu0 %v210
  %245 = vmatprep.subr.bf16.mxu0 0
  %246 = vmatpush1.bf16.msra.mxu0 %v211
  %247 = vmatprep.subr.bf16.mxu0 0
  %248 = vmatpush1.bf16.msra.mxu0 %v212
  %249 = vmatprep.subr.bf16.mxu0 0
  %250 = vmatpush1.bf16.msra.mxu0 %v213
  %251 = vmatprep.subr.bf16.mxu0 0
  %252 = vmatpush1.bf16.msra.mxu0 %v214
  %253 = vmatprep.subr.bf16.mxu0 0
  %254 = vmatpush1.bf16.msra.mxu0 %v215
  %255 = vmatprep.subr.bf16.mxu0 0
  %256 = vmatpush1.bf16.msra.mxu0 %v216
  %257 = vmatprep.subr.bf16.mxu0 0
  %258 = vmatpush1.bf16.msra.mxu0 %v217
  %259 = vmatprep.subr.bf16.mxu0 0
  %260 = vmatpush1.bf16.msra.mxu0 %v218
  %261 = vmatprep.subr.bf16.mxu0 0
  %262 = vmatpush1.bf16.msra.mxu0 %v219
  %263 = vmatprep.subr.bf16.mxu0 0
  %264 = vmatpush1.bf16.msra.mxu0 %v220
  %265 = vmatprep.subr.bf16.mxu0 0
  %266 = vmatpush1.bf16.msra.mxu0 %v221
  %267 = vmatprep.subr.bf16.mxu0 0
  %268 = vmatpush1.bf16.msra.mxu0 %v222
  %269 = vmatprep.subr.bf16.mxu0 0
  %270 = vmatpush1.bf16.msra.mxu0 %v223
  %271 = vmatprep.subr.bf16.mxu0 0
  %272 = vmatpush1.bf16.msra.mxu0 %v224
  %273 = vmatprep.mubr.bf16.mxu0 %v114
  %274 = vmatmul.mubr.bf16.gmra.mrb[0].mxu0 %v113
  %v275 = vpop.f32.mrb[0].mxu0
  %v276 = vadd.f32 0.0, %v275
  %v277 = vpop.f32.mrb[0].mxu0
  %v278 = vpop.f32.mrb[0].mxu0
  %v279 = vadd.f32 0.0, %v278
  %v280 = vpop.f32.mrb[0].mxu0
  %281 = vmatprep.mubr.bf16.mxu0 %v116
  %282 = vmatmul.mubr.bf16.gmra.mrb[0].mxu0 %v115
  %v283 = vpop.f32.mrb[0].mxu0
  %v284 = vadd.f32 0.0, %v283
  %v285 = vpop.f32.mrb[0].mxu0
  %v286 = vpop.f32.mrb[0].mxu0
  %v287 = vadd.f32 0.0, %v286
  %v288 = vpop.f32.mrb[0].mxu0
  %289 = vmatprep.mubr.bf16.mxu0 %v118
  %290 = vmatmul.mubr.bf16.gmra.mrb[0].mxu0 %v117
  %v291 = vpop.f32.mrb[0].mxu0
  %v292 = vadd.f32 0.0, %v291
  %v293 = vpop.f32.mrb[0].mxu0
  %v294 = vpop.f32.mrb[0].mxu0
  %v295 = vadd.f32 0.0, %v294
  %v296 = vpop.f32.mrb[0].mxu0
  %297 = vmatprep.mubr.bf16.mxu0 %v120
  %298 = vmatmul.mubr.bf16.gmra.mrb[0].mxu0 %v119
  %v299 = vpop.f32.mrb[0].mxu0
  %v300 = vadd.f32 0.0, %v299
  %v301 = vpop.f32.mrb[0].mxu0
  %v302 = vpop.f32.mrb[0].mxu0
  %v303 = vadd.f32 0.0, %v302
  %v304 = vpop.f32.mrb[0].mxu0
  %305 = vmatprep.mubr.bf16.mxu0 %v122
  %306 = vmatmul.mubr.bf16.gmra.mrb[0].mxu0 %v121
  %v307 = vpop.f32.mrb[0].mxu0
  %v308 = vadd.f32 0.0, %v307
  %v309 = vpop.f32.mrb[0].mxu0
  %v310 = vpop.f32.mrb[0].mxu0
  %v311 = vadd.f32 0.0, %v310
  %v312 = vpop.f32.mrb[0].mxu0
  %313 = vmatprep.mubr.bf16.mxu0 %v124
  %314 = vmatmul.mubr.bf16.gmra.mrb[0].mxu0 %v123
  %v315 = vpop.f32.mrb[0].mxu0
  %v316 = vadd.f32 0.0, %v315
  %v317 = vpop.f32.mrb[0].mxu0
  %v318 = vpop.f32.mrb[0].mxu0
  %v319 = vadd.f32 0.0, %v318
  %v320 = vpop.f32.mrb[0].mxu0
  %321 = vmatprep.mubr.bf16.mxu0 %v126
  %322 = vmatmul.mubr.bf16.gmra.mrb[0].mxu0 %v125
  %v323 = vpop.f32.mrb[0].mxu0
  %v324 = vadd.f32 0.0, %v323
  %v325 = vpop.f32.mrb[0].mxu0
  %v326 = vpop.f32.mrb[0].mxu0
  %v327 = vadd.f32 0.0, %v326
  %v328 = vpop.f32.mrb[0].mxu0
  %329 = vmatprep.mubr.bf16.mxu0 %v128
  %330 = vmatmul.mubr.bf16.gmra.mrb[0].mxu0 %v127
  %v331 = vpop.f32.mrb[0].mxu0
  %v332 = vadd.f32 0.0, %v331
  %v333 = vpop.f32.mrb[0].mxu0
  %v334 = vpop.f32.mrb[0].mxu0
  %v335 = vadd.f32 0.0, %v334
  %v336 = vpop.f32.mrb[0].mxu0
  %337 = vdwg.mxu0
  %v338 = vmax.f32 %v276, 0.0
  %v339 = vmax.f32 %v279, 0.0
  %v340 = vmax.f32 %v284, 0.0
  %v341 = vmax.f32 %v287, 0.0
  %v342 = vmax.f32 %v292, 0.0
  %v343 = vmax.f32 %v295, 0.0
  %v344 = vmax.f32 %v300, 0.0
  %v345 = vmax.f32 %v303, 0.0
  %v346 = vmax.f32 %v308, 0.0
  %v347 = vmax.f32 %v311, 0.0
  %v348 = vmax.f32 %v316, 0.0
  %v349 = vmax.f32 %v319, 0.0
  %v350 = vmax.f32 %v324, 0.0
  %v351 = vmax.f32 %v327, 0.0
  %v352 = vmax.f32 %v332, 0.0
  %v353 = vmax.f32 %v335, 0.0
  %v354 = vpack.c.bf16 %v339, %v338
  %v355 = vpack.c.bf16 %v341, %v340
  %v356 = vpack.c.bf16 %v343, %v342
  %v357 = vpack.c.bf16 %v345, %v344
  %v358 = vpack.c.bf16 %v347, %v346
  %v359 = vpack.c.bf16 %v349, %v348
  %v360 = vpack.c.bf16 %v351, %v350
  %v361 = vpack.c.bf16 %v353, %v352
  %v370 = vunpack.c.l.b16 %v354
  %v371 = vunpack.c.h.b16 %v354
  %v372 = vunpack.c.l.b16 %v355
  %v373 = vunpack.c.h.b16 %v355
  %v374 = vunpack.c.l.b16 %v356
  %v375 = vunpack.c.h.b16 %v356
  %v376 = vunpack.c.l.b16 %v357
  %v377 = vunpack.c.h.b16 %v357
  %v378 = vunpack.c.l.b16 %v358
  %v379 = vunpack.c.h.b16 %v358
  %v380 = vunpack.c.l.b16 %v359
  %v381 = vunpack.c.h.b16 %v359
  %v382 = vunpack.c.l.b16 %v360
  %v383 = vunpack.c.h.b16 %v360
  %v384 = vunpack.c.l.b16 %v361
  %v385 = vunpack.c.h.b16 %v361
  %v386 = vpack.c.b16 %v370, %v370
  %v387 = vpack.c.b16 %v371, %v371
  %v388 = vpack.c.b16 %v372, %v372
  %v389 = vpack.c.b16 %v373, %v373
  %v390 = vpack.c.b16 %v374, %v374
  %v391 = vpack.c.b16 %v375, %v375
  %v392 = vpack.c.b16 %v376, %v376
  %v393 = vpack.c.b16 %v377, %v377
  %v394 = vpack.c.b16 %v378, %v378
  %v395 = vpack.c.b16 %v379, %v379
  %v396 = vpack.c.b16 %v380, %v380
  %v397 = vpack.c.b16 %v381, %v381
  %v398 = vpack.c.b16 %v382, %v382
  %v399 = vpack.c.b16 %v383, %v383
  %v400 = vpack.c.b16 %v384, %v384
  %v401 = vpack.c.b16 %v385, %v385
  %418 = vst [vmem:[%s3] sm:$0xf] %v386
  %419 = vst [vmem:[%s3 + $0x4] sm:$0xf] %v387
  %420 = vst [vmem:[%s3 + $0x8] sm:$0xf] %v388
  %421 = vst [vmem:[%s3 + $0xc] sm:$0xf] %v389
  %422 = vst [vmem:[%s3 + $0x10] sm:$0xf] %v390
  %423 = vst [vmem:[%s3 + $0x14] sm:$0xf] %v391
  %424 = vst [vmem:[%s3 + $0x18] sm:$0xf] %v392
  %425 = vst [vmem:[%s3 + $0x1c] sm:$0xf] %v393
  %426 = vst [vmem:[%s3 + $0x20] sm:$0xf] %v394
  %427 = vst [vmem:[%s3 + $0x24] sm:$0xf] %v395
  %428 = vst [vmem:[%s3 + $0x28] sm:$0xf] %v396
  %429 = vst [vmem:[%s3 + $0x2c] sm:$0xf] %v397
  %430 = vst [vmem:[%s3 + $0x30] sm:$0xf] %v398
  %431 = vst [vmem:[%s3 + $0x34] sm:$0xf] %v399
  %432 = vst [vmem:[%s3 + $0x38] sm:$0xf] %v400
  %433 = vst [vmem:[%s3 + $0x3c] sm:$0xf] %v401
  %v434 = vld [vmem:[%s2] sm:$0xf]
  %v435 = vld [vmem:[%s2 + $0x4] sm:$0xf]
  %v436 = vld [vmem:[%s2 + $0x8] sm:$0xf]
  %v437 = vld [vmem:[%s2 + $0xc] sm:$0xf]
  %v438 = vld [vmem:[%s2 + $0x10] sm:$0xf]
  %v439 = vld [vmem:[%s2 + $0x14] sm:$0xf]
  %v440 = vld [vmem:[%s2 + $0x18] sm:$0xf]
  %v441 = vld [vmem:[%s2 + $0x1c] sm:$0xf]
  %v442 = vld [vmem:[%s2 + $0x20] sm:$0xf]
  %v443 = vld [vmem:[%s2 + $0x24] sm:$0xf]
  %v444 = vld [vmem:[%s2 + $0x28] sm:$0xf]
  %v445 = vld [vmem:[%s2 + $0x2c] sm:$0xf]
  %v446 = vld [vmem:[%s2 + $0x30] sm:$0xf]
  %v447 = vld [vmem:[%s2 + $0x34] sm:$0xf]
  %v448 = vld [vmem:[%s2 + $0x38] sm:$0xf]
  %v449 = vld [vmem:[%s2 + $0x3c] sm:$0xf]
  %v450 = vld [vmem:[%s2 + $0x40] sm:$0xf]
  %v451 = vld [vmem:[%s2 + $0x44] sm:$0xf]
  %v452 = vld [vmem:[%s2 + $0x48] sm:$0xf]
  %v453 = vld [vmem:[%s2 + $0x4c] sm:$0xf]
  %v454 = vld [vmem:[%s2 + $0x50] sm:$0xf]
  %v455 = vld [vmem:[%s2 + $0x54] sm:$0xf]
  %v456 = vld [vmem:[%s2 + $0x58] sm:$0xf]
  %v457 = vld [vmem:[%s2 + $0x5c] sm:$0xf]
  %v458 = vld [vmem:[%s2 + $0x60] sm:$0xf]
  %v459 = vld [vmem:[%s2 + $0x64] sm:$0xf]
  %v460 = vld [vmem:[%s2 + $0x68] sm:$0xf]
  %v461 = vld [vmem:[%s2 + $0x6c] sm:$0xf]
  %v462 = vld [vmem:[%s2 + $0x70] sm:$0xf]
  %v463 = vld [vmem:[%s2 + $0x74] sm:$0xf]
  %v464 = vld [vmem:[%s2 + $0x78] sm:$0xf]
  %v465 = vld [vmem:[%s2 + $0x7c] sm:$0xf]
  %v498 = vunpack.c.l.b16 %v434
  %v499 = vunpack.c.l.b16 %v435
  %v500 = vunpack.c.l.b16 %v436
  %v501 = vunpack.c.l.b16 %v437
  %v502 = vunpack.c.l.b16 %v438
  %v503 = vunpack.c.l.b16 %v439
  %v504 = vunpack.c.l.b16 %v440
  %v505 = vunpack.c.l.b16 %v441
  %v506 = vunpack.c.l.b16 %v442
  %v507 = vunpack.c.l.b16 %v443
  %v508 = vunpack.c.l.b16 %v444
  %v509 = vunpack.c.l.b16 %v445
  %v510 = vunpack.c.l.b16 %v446
  %v511 = vunpack.c.l.b16 %v447
  %v512 = vunpack.c.l.b16 %v448
  %v513 = vunpack.c.l.b16 %v449
  %v514 = vunpack.c.l.b16 %v450
  %v515 = vunpack.c.l.b16 %v451
  %v516 = vunpack.c.l.b16 %v452
  %v517 = vunpack.c.l.b16 %v453
  %v518 = vunpack.c.l.b16 %v454
  %v519 = vunpack.c.l.b16 %v455
  %v520 = vunpack.c.l.b16 %v456
  %v521 = vunpack.c.l.b16 %v457
  %v522 = vunpack.c.l.b16 %v458
  %v523 = vunpack.c.l.b16 %v459
  %v524 = vunpack.c.l.b16 %v460
  %v525 = vunpack.c.l.b16 %v461
  %v526 = vunpack.c.l.b16 %v462
  %v527 = vunpack.c.l.b16 %v463
  %v528 = vunpack.c.l.b16 %v464
  %v529 = vunpack.c.l.b16 %v465
  %v530 = vpack.c.b16 %v499, %v498
  %v531 = vpack.c.b16 %v501, %v500
  %v532 = vpack.c.b16 %v503, %v502
  %v533 = vpack.c.b16 %v505, %v504
  %v534 = vpack.c.b16 %v507, %v506
  %v535 = vpack.c.b16 %v509, %v508
  %v536 = vpack.c.b16 %v511, %v510
  %v537 = vpack.c.b16 %v513, %v512
  %v538 = vpack.c.b16 %v515, %v514
  %v539 = vpack.c.b16 %v517, %v516
  %v540 = vpack.c.b16 %v519, %v518
  %v541 = vpack.c.b16 %v521, %v520
  %v542 = vpack.c.b16 %v523, %v522
  %v543 = vpack.c.b16 %v525, %v524
  %v544 = vpack.c.b16 %v527, %v526
  %v545 = vpack.c.b16 %v529, %v528
  %562 = vmatprep.subr.bf16.mxu0 0
  %563 = vmatpush1.bf16.msra.mxu0 %v530
  %564 = vmatprep.subr.bf16.mxu0 0
  %565 = vmatpush1.bf16.msra.mxu0 %v531
  %566 = vmatprep.subr.bf16.mxu0 0
  %567 = vmatpush1.bf16.msra.mxu0 %v532
  %568 = vmatprep.subr.bf16.mxu0 0
  %569 = vmatpush1.bf16.msra.mxu0 %v533
  %570 = vmatprep.subr.bf16.mxu0 0
  %571 = vmatpush1.bf16.msra.mxu0 %v534
  %572 = vmatprep.subr.bf16.mxu0 0
  %573 = vmatpush1.bf16.msra.mxu0 %v535
  %574 = vmatprep.subr.bf16.mxu0 0
  %575 = vmatpush1.bf16.msra.mxu0 %v536
  %576 = vmatprep.subr.bf16.mxu0 0
  %577 = vmatpush1.bf16.msra.mxu0 %v537
  %578 = vmatprep.subr.bf16.mxu0 0
  %579 = vmatpush1.bf16.msra.mxu0 %v538
  %580 = vmatprep.subr.bf16.mxu0 0
  %581 = vmatpush1.bf16.msra.mxu0 %v539
  %582 = vmatprep.subr.bf16.mxu0 0
  %583 = vmatpush1.bf16.msra.mxu0 %v540
  %584 = vmatprep.subr.bf16.mxu0 0
  %585 = vmatpush1.bf16.msra.mxu0 %v541
  %586 = vmatprep.subr.bf16.mxu0 0
  %587 = vmatpush1.bf16.msra.mxu0 %v542
  %588 = vmatprep.subr.bf16.mxu0 0
  %589 = vmatpush1.bf16.msra.mxu0 %v543
  %590 = vmatprep.subr.bf16.mxu0 0
  %591 = vmatpush1.bf16.msra.mxu0 %v544
  %592 = vmatprep.subr.bf16.mxu0 0
  %593 = vmatpush1.bf16.msra.mxu0 %v545
  %594 = vmatprep.mubr.bf16.mxu0 %v114
  %595 = vmatmul.mubr.bf16.gmra.mrb[0].mxu0 %v113
  %v596 = vpop.f32.mrb[0].mxu0
  %v597 = vadd.f32 0.0, %v596
  %v598 = vpop.f32.mrb[0].mxu0
  %v599 = vpop.f32.mrb[0].mxu0
  %v600 = vadd.f32 0.0, %v599
  %v601 = vpop.f32.mrb[0].mxu0
  %602 = vmatprep.mubr.bf16.mxu0 %v116
  %603 = vmatmul.mubr.bf16.gmra.mrb[0].mxu0 %v115
  %v604 = vpop.f32.mrb[0].mxu0
  %v605 = vadd.f32 0.0, %v604
  %v606 = vpop.f32.mrb[0].mxu0
  %v607 = vpop.f32.mrb[0].mxu0
  %v608 = vadd.f32 0.0, %v607
  %v609 = vpop.f32.mrb[0].mxu0
  %610 = vmatprep.mubr.bf16.mxu0 %v118
  %611 = vmatmul.mubr.bf16.gmra.mrb[0].mxu0 %v117
  %v612 = vpop.f32.mrb[0].mxu0
  %v613 = vadd.f32 0.0, %v612
  %v614 = vpop.f32.mrb[0].mxu0
  %v615 = vpop.f32.mrb[0].mxu0
  %v616 = vadd.f32 0.0, %v615
  %v617 = vpop.f32.mrb[0].mxu0
  %618 = vmatprep.mubr.bf16.mxu0 %v120
  %619 = vmatmul.mubr.bf16.gmra.mrb[0].mxu0 %v119
  %v620 = vpop.f32.mrb[0].mxu0
  %v621 = vadd.f32 0.0, %v620
  %v622 = vpop.f32.mrb[0].mxu0
  %v623 = vpop.f32.mrb[0].mxu0
  %v624 = vadd.f32 0.0, %v623
  %v625 = vpop.f32.mrb[0].mxu0
  %626 = vmatprep.mubr.bf16.mxu0 %v122
  %627 = vmatmul.mubr.bf16.gmra.mrb[0].mxu0 %v121
  %v628 = vpop.f32.mrb[0].mxu0
  %v629 = vadd.f32 0.0, %v628
  %v630 = vpop.f32.mrb[0].mxu0
  %v631 = vpop.f32.mrb[0].mxu0
  %v632 = vadd.f32 0.0, %v631
  %v633 = vpop.f32.mrb[0].mxu0
  %634 = vmatprep.mubr.bf16.mxu0 %v124
  %635 = vmatmul.mubr.bf16.gmra.mrb[0].mxu0 %v123
  %v636 = vpop.f32.mrb[0].mxu0
  %v637 = vadd.f32 0.0, %v636
  %v638 = vpop.f32.mrb[0].mxu0
  %v639 = vpop.f32.mrb[0].mxu0
  %v640 = vadd.f32 0.0, %v639
  %v641 = vpop.f32.mrb[0].mxu0
  %642 = vmatprep.mubr.bf16.mxu0 %v126
  %643 = vmatmul.mubr.bf16.gmra.mrb[0].mxu0 %v125
  %v644 = vpop.f32.mrb[0].mxu0
  %v645 = vadd.f32 0.0, %v644
  %v646 = vpop.f32.mrb[0].mxu0
  %v647 = vpop.f32.mrb[0].mxu0
  %v648 = vadd.f32 0.0, %v647
  %v649 = vpop.f32.mrb[0].mxu0
  %650 = vmatprep.mubr.bf16.mxu0 %v128
  %651 = vmatmul.mubr.bf16.gmra.mrb[0].mxu0 %v127
  %v652 = vpop.f32.mrb[0].mxu0
  %v653 = vadd.f32 0.0, %v652
  %v654 = vpop.f32.mrb[0].mxu0
  %v655 = vpop.f32.mrb[0].mxu0
  %v656 = vadd.f32 0.0, %v655
  %v657 = vpop.f32.mrb[0].mxu0
  %658 = vdwg.mxu0
  %659 = vst [vmem:[%s4] sm:$0xff] %v597
  %660 = vst [vmem:[%s4 + $0x8] sm:$0xff] %v600
  %661 = vst [vmem:[%s4 + $0x10] sm:$0xff] %v605
  %662 = vst [vmem:[%s4 + $0x18] sm:$0xff] %v608
  %663 = vst [vmem:[%s4 + $0x20] sm:$0xff] %v613
  %664 = vst [vmem:[%s4 + $0x28] sm:$0xff] %v616
  %665 = vst [vmem:[%s4 + $0x30] sm:$0xff] %v621
  %666 = vst [vmem:[%s4 + $0x38] sm:$0xff] %v624
  %667 = vst [vmem:[%s4 + $0x40] sm:$0xff] %v629
  %668 = vst [vmem:[%s4 + $0x48] sm:$0xff] %v632
  %669 = vst [vmem:[%s4 + $0x50] sm:$0xff] %v637
  %670 = vst [vmem:[%s4 + $0x58] sm:$0xff] %v640
  %671 = vst [vmem:[%s4 + $0x60] sm:$0xff] %v645
  %672 = vst [vmem:[%s4 + $0x68] sm:$0xff] %v648
  %673 = vst [vmem:[%s4 + $0x70] sm:$0xff] %v653
  %674 = vst [vmem:[%s4 + $0x78] sm:$0xff] %v656
  // Predicated region
  $region14: #{extra_bottleneck1_forward.2} parent=0 // pred_check
    _
  $region15: #{extra_bottleneck1_forward.2} parent=0 // pred_check_branch
    %676 = sbr.rel (0) target = $region17
  $region16: #{extra_bottleneck1_forward.2} parent=0 // pred_region
    _
  $region17: #{extra_bottleneck1_forward.2} parent=0 // pred_fallthru
    _
  // Predicated region
  $region18: #{extra_bottleneck1_forward.2} parent=0 // pred_check
    _
  $region19: #{extra_bottleneck1_forward.2} parent=0 // pred_check_branch
    %678 = sbr.rel (0) target = $region21
  $region20: #{extra_bottleneck1_forward.2} parent=0 // pred_region
    _
  $region21: #{extra_bottleneck1_forward.2} parent=0 // pred_fallthru
    _
  // Predicated region
  $region22: #{extra_bottleneck1_forward.2} parent=0 // pred_check
    _
  $region23: #{extra_bottleneck1_forward.2} parent=0 // pred_check_branch
    %680 = sbr.rel (0) target = $region25
  $region24: #{extra_bottleneck1_forward.2} parent=0 // pred_region
    _
  $region25: #{extra_bottleneck1_forward.2} parent=0 // pred_fallthru
    _
  // Predicated region
  $region26: #{extra_bottleneck1_forward.2} parent=0 // pred_check
    _
  $region27: #{extra_bottleneck1_forward.2} parent=0 // pred_check_branch
    %682 = sbr.rel (0) target = $region29
  $region28: #{extra_bottleneck1_forward.2} parent=0 // pred_region
    _
  $region29: #{extra_bottleneck1_forward.2} parent=0 // pred_fallthru
    _

// kernel: extra_bottleneck1_forward.3
$region0: #{extra_bottleneck1_forward.3}
  #allocation0 [shape = 'u32[]', space=smem, size = 0x4, offset = 0x4, fixed_abs, tag = 'smem constant byte address 0x4 - core index']
  #allocation1 [shape = 'u32[144,128]{1,0:T(1,128)}', space=vmem, size = 0x12000, scoped, tag = 'internal scratch']
  %s0 = inlined_call_operand.vmem [shape: bf16[128,1152], index: 0, kind: input, shape index: {}]
  %s1 = inlined_call_operand.vmem [shape: bf16[1152,128], index: 1, kind: input, shape index: {}]
  %s2 = inlined_call_operand.vmem [shape: bf16[128,128], index: 2, kind: input, shape index: {}]
  %s3 = inlined_call_operand.vmem [shape: f32[128,128], index: 3, kind: input, shape index: {}]
  %s4 = inlined_call_operand.hbm [shape: f32[128,128], index: 4, kind: output, shape index: {}]
  %s5 = sld [smem:[#allocation0]]
  $region26: #{extra_bottleneck1_forward.3} parent=0
    _
  %s7 = ssub.s32 1, %s5
  %s8 = scalar_select 0, %s7, %s5
  $region1: #{extra_bottleneck1_forward.3} parent=0
    #allocation2 [shape = 'u8[65536]{0}', space=vmem, size = 0x10000, scoped, tag = 'output window, operand 0, single buffered']
    #allocation3 [shape = 's32[1]{0}', space=sflag, size = 0x4, scoped, tag = 'scoped memory for extra_bottleneck1_forward.3']
    %9 = vsyncpa [#allocation3], 0
    // Predicated region
    $region2: #{extra_bottleneck1_forward.3} parent=1 // pred_check
      _
    $region3: #{extra_bottleneck1_forward.3} parent=1 // pred_check_branch
      %11 = sbr.rel (0) target = $region5
    $region4: #{extra_bottleneck1_forward.3} parent=1 // pred_region
      _
    $region5: #{extra_bottleneck1_forward.3} parent=1 // pred_fallthru
      _
    // Predicated region
    $region6: #{extra_bottleneck1_forward.3} parent=1 // pred_check
      _
    $region7: #{extra_bottleneck1_forward.3} parent=1 // pred_check_branch
      %13 = sbr.rel (0) target = $region9
    $region8: #{extra_bottleneck1_forward.3} parent=1 // pred_region
      _
    $region9: #{extra_bottleneck1_forward.3} parent=1 // pred_fallthru
      _
    // Predicated region
    $region10: #{extra_bottleneck1_forward.3} parent=1 // pred_check
      _
    $region11: #{extra_bottleneck1_forward.3} parent=1 // pred_check_branch
      %15 = sbr.rel (0) target = $region13
    $region12: #{extra_bottleneck1_forward.3} parent=1 // pred_region
      _
    $region13: #{extra_bottleneck1_forward.3} parent=1 // pred_fallthru
      _
    // Predicated region
    $region14: #{extra_bottleneck1_forward.3} parent=1 // pred_check
      _
    $region15: #{extra_bottleneck1_forward.3} parent=1 // pred_check_branch
      %17 = sbr.rel (0) target = $region17
    $region16: #{extra_bottleneck1_forward.3} parent=1 // pred_region
      _
    $region17: #{extra_bottleneck1_forward.3} parent=1 // pred_fallthru
      _
    %v19 = vld [vmem:[%s0] sm:$0xff]
    %v20 = vld [vmem:[%s0 + $0x8] sm:$0xff]
    %v21 = vld [vmem:[%s0 + $0x10] sm:$0xff]
    %v22 = vld [vmem:[%s0 + $0x18] sm:$0xff]
    %v23 = vld [vmem:[%s0 + $0x20] sm:$0xf]
    %v24 = vld [vmem:[%s0 + $0x24] sm:$0xff]
    %v25 = vld [vmem:[%s0 + $0x2c] sm:$0xff]
    %v26 = vld [vmem:[%s0 + $0x34] sm:$0xff]
    %v27 = vld [vmem:[%s0 + $0x3c] sm:$0xff]
    %v28 = vld [vmem:[%s0 + $0x44] sm:$0xf]
    %v29 = vld [vmem:[%s0 + $0x48] sm:$0xff]
    %v30 = vld [vmem:[%s0 + $0x50] sm:$0xff]
    %v31 = vld [vmem:[%s0 + $0x58] sm:$0xff]
    %v32 = vld [vmem:[%s0 + $0x60] sm:$0xff]
    %v33 = vld [vmem:[%s0 + $0x68] sm:$0xf]
    %v34 = vld [vmem:[%s0 + $0x6c] sm:$0xff]
    %v35 = vld [vmem:[%s0 + $0x74] sm:$0xff]
    %v36 = vld [vmem:[%s0 + $0x7c] sm:$0xff]
    %v37 = vld [vmem:[%s0 + $0x84] sm:$0xff]
    %v38 = vld [vmem:[%s0 + $0x8c] sm:$0xf]
    %v39 = vld [vmem:[%s0 + $0x90] sm:$0xff]
    %v40 = vld [vmem:[%s0 + $0x98] sm:$0xff]
    %v41 = vld [vmem:[%s0 + $0xa0] sm:$0xff]
    %v42 = vld [vmem:[%s0 + $0xa8] sm:$0xff]
    %v43 = vld [vmem:[%s0 + $0xb0] sm:$0xf]
    %v44 = vld [vmem:[%s0 + $0xb4] sm:$0xff]
    %v45 = vld [vmem:[%s0 + $0xbc] sm:$0xff]
    %v46 = vld [vmem:[%s0 + $0xc4] sm:$0xff]
    %v47 = vld [vmem:[%s0 + $0xcc] sm:$0xff]
    %v48 = vld [vmem:[%s0 + $0xd4] sm:$0xf]
    %v49 = vld [vmem:[%s0 + $0xd8] sm:$0xff]
    %v50 = vld [vmem:[%s0 + $0xe0] sm:$0xff]
    %v51 = vld [vmem:[%s0 + $0xe8] sm:$0xff]
    %v52 = vld [vmem:[%s0 + $0xf0] sm:$0xff]
    %v53 = vld [vmem:[%s0 + $0xf8] sm:$0xf]
    %v54 = vld [vmem:[%s0 + $0xfc] sm:$0xff]
    %v55 = vld [vmem:[%s0 + $0x104] sm:$0xff]
    %v56 = vld [vmem:[%s0 + $0x10c] sm:$0xff]
    %v57 = vld [vmem:[%s0 + $0x114] sm:$0xff]
    %v58 = vld [vmem:[%s0 + $0x11c] sm:$0xf]
    %v59 = vld [vmem:[%s0 + $0x120] sm:$0xff]
    %v60 = vld [vmem:[%s0 + $0x128] sm:$0xff]
    %v61 = vld [vmem:[%s0 + $0x130] sm:$0xff]
    %v62 = vld [vmem:[%s0 + $0x138] sm:$0xff]
    %v63 = vld [vmem:[%s0 + $0x140] sm:$0xf]
    %v64 = vld [vmem:[%s0 + $0x144] sm:$0xff]
    %v65 = vld [vmem:[%s0 + $0x14c] sm:$0xff]
    %v66 = vld [vmem:[%s0 + $0x154] sm:$0xff]
    %v67 = vld [vmem:[%s0 + $0x15c] sm:$0xff]
    %v68 = vld [vmem:[%s0 + $0x164] sm:$0xf]
    %v69 = vld [vmem:[%s0 + $0x168] sm:$0xff]
    %v70 = vld [vmem:[%s0 + $0x170] sm:$0xff]
    %v71 = vld [vmem:[%s0 + $0x178] sm:$0xff]
    %v72 = vld [vmem:[%s0 + $0x180] sm:$0xff]
    %v73 = vld [vmem:[%s0 + $0x188] sm:$0xf]
    %v74 = vld [vmem:[%s0 + $0x18c] sm:$0xff]
    %v75 = vld [vmem:[%s0 + $0x194] sm:$0xff]
    %v76 = vld [vmem:[%s0 + $0x19c] sm:$0xff]
    %v77 = vld [vmem:[%s0 + $0x1a4] sm:$0xff]
    %v78 = vld [vmem:[%s0 + $0x1ac] sm:$0xf]
    %v79 = vld [vmem:[%s0 + $0x1b0] sm:$0xff]
    %v80 = vld [vmem:[%s0 + $0x1b8] sm:$0xff]
    %v81 = vld [vmem:[%s0 + $0x1c0] sm:$0xff]
    %v82 = vld [vmem:[%s0 + $0x1c8] sm:$0xff]
    %v83 = vld [vmem:[%s0 + $0x1d0] sm:$0xf]
    %v84 = vld [vmem:[%s0 + $0x1d4] sm:$0xff]
    %v85 = vld [vmem:[%s0 + $0x1dc] sm:$0xff]
    %v86 = vld [vmem:[%s0 + $0x1e4] sm:$0xff]
    %v87 = vld [vmem:[%s0 + $0x1ec] sm:$0xff]
    %v88 = vld [vmem:[%s0 + $0x1f4] sm:$0xf]
    %v89 = vld [vmem:[%s0 + $0x1f8] sm:$0xff]
    %v90 = vld [vmem:[%s0 + $0x200] sm:$0xff]
    %v91 = vld [vmem:[%s0 + $0x208] sm:$0xff]
    %v92 = vld [vmem:[%s0 + $0x210] sm:$0xff]
    %v93 = vld [vmem:[%s0 + $0x218] sm:$0xf]
    %v94 = vld [vmem:[%s0 + $0x21c] sm:$0xff]
    %v95 = vld [vmem:[%s0 + $0x224] sm:$0xff]
    %v96 = vld [vmem:[%s0 + $0x22c] sm:$0xff]
    %v97 = vld [vmem:[%s0 + $0x234] sm:$0xff]
    %v98 = vld [vmem:[%s0 + $0x23c] sm:$0xf]
    %v99 = vld [vmem:[%s1] sm:$0xf]
    %v100 = vld [vmem:[%s1 + $0x4] sm:$0xf]
    %v101 = vld [vmem:[%s1 + $0x8] sm:$0xf]
    %v102 = vld [vmem:[%s1 + $0xc] sm:$0xf]
    %v103 = vld [vmem:[%s1 + $0x10] sm:$0xf]
    %v104 = vld [vmem:[%s1 + $0x14] sm:$0xf]
    %v105 = vld [vmem:[%s1 + $0x18] sm:$0xf]
    %v106 = vld [vmem:[%s1 + $0x1c] sm:$0xf]
    %v107 = vld [vmem:[%s1 + $0x20] sm:$0xf]
    %v108 = vld [vmem:[%s1 + $0x24] sm:$0xf]
    %v109 = vld [vmem:[%s1 + $0x28] sm:$0xf]
    %v110 = vld [vmem:[%s1 + $0x2c] sm:$0xf]
    %v111 = vld [vmem:[%s1 + $0x30] sm:$0xf]
    %v112 = vld [vmem:[%s1 + $0x34] sm:$0xf]
    %v113 = vld [vmem:[%s1 + $0x38] sm:$0xf]
    %v114 = vld [vmem:[%s1 + $0x3c] sm:$0xf]
    %v115 = vld [vmem:[%s1 + $0x40] sm:$0xf]
    %v116 = vld [vmem:[%s1 + $0x44] sm:$0xf]
    %v117 = vld [vmem:[%s1 + $0x48] sm:$0xf]
    %v118 = vld [vmem:[%s1 + $0x4c] sm:$0xf]
    %v119 = vld [vmem:[%s1 + $0x50] sm:$0xf]
    %v120 = vld [vmem:[%s1 + $0x54] sm:$0xf]
    %v121 = vld [vmem:[%s1 + $0x58] sm:$0xf]
    %v122 = vld [vmem:[%s1 + $0x5c] sm:$0xf]
    %v123 = vld [vmem:[%s1 + $0x60] sm:$0xf]
    %v124 = vld [vmem:[%s1 + $0x64] sm:$0xf]
    %v125 = vld [vmem:[%s1 + $0x68] sm:$0xf]
    %v126 = vld [vmem:[%s1 + $0x6c] sm:$0xf]
    %v127 = vld [vmem:[%s1 + $0x70] sm:$0xf]
    %v128 = vld [vmem:[%s1 + $0x74] sm:$0xf]
    %v129 = vld [vmem:[%s1 + $0x78] sm:$0xf]
    %v130 = vld [vmem:[%s1 + $0x7c] sm:$0xf]
    %v131 = vld [vmem:[%s1 + $0x80] sm:$0xf]
    %v132 = vld [vmem:[%s1 + $0x84] sm:$0xf]
    %v133 = vld [vmem:[%s1 + $0x88] sm:$0xf]
    %v134 = vld [vmem:[%s1 + $0x8c] sm:$0xf]
    %v135 = vld [vmem:[%s1 + $0x90] sm:$0xf]
    %v136 = vld [vmem:[%s1 + $0x94] sm:$0xf]
    %v137 = vld [vmem:[%s1 + $0x98] sm:$0xf]
    %v138 = vld [vmem:[%s1 + $0x9c] sm:$0xf]
    %v139 = vld [vmem:[%s1 + $0xa0] sm:$0xf]
    %v140 = vld [vmem:[%s1 + $0xa4] sm:$0xf]
    %v141 = vld [vmem:[%s1 + $0xa8] sm:$0xf]
    %v142 = vld [vmem:[%s1 + $0xac] sm:$0xf]
    %v143 = vld [vmem:[%s1 + $0xb0] sm:$0xf]
    %v144 = vld [vmem:[%s1 + $0xb4] sm:$0xf]
    %v145 = vld [vmem:[%s1 + $0xb8] sm:$0xf]
    %v146 = vld [vmem:[%s1 + $0xbc] sm:$0xf]
    %v147 = vld [vmem:[%s1 + $0xc0] sm:$0xf]
    %v148 = vld [vmem:[%s1 + $0xc4] sm:$0xf]
    %v149 = vld [vmem:[%s1 + $0xc8] sm:$0xf]
    %v150 = vld [vmem:[%s1 + $0xcc] sm:$0xf]
    %v151 = vld [vmem:[%s1 + $0xd0] sm:$0xf]
    %v152 = vld [vmem:[%s1 + $0xd4] sm:$0xf]
    %v153 = vld [vmem:[%s1 + $0xd8] sm:$0xf]
    %v154 = vld [vmem:[%s1 + $0xdc] sm:$0xf]
    %v155 = vld [vmem:[%s1 + $0xe0] sm:$0xf]
    %v156 = vld [vmem:[%s1 + $0xe4] sm:$0xf]
    %v157 = vld [vmem:[%s1 + $0xe8] sm:$0xf]
    %v158 = vld [vmem:[%s1 + $0xec] sm:$0xf]
    %v159 = vld [vmem:[%s1 + $0xf0] sm:$0xf]
    %v160 = vld [vmem:[%s1 + $0xf4] sm:$0xf]
    %v161 = vld [vmem:[%s1 + $0xf8] sm:$0xf]
    %v162 = vld [vmem:[%s1 + $0xfc] sm:$0xf]
    %v163 = vld [vmem:[%s1 + $0x100] sm:$0xf]
    %v164 = vld [vmem:[%s1 + $0x104] sm:$0xf]
    %v165 = vld [vmem:[%s1 + $0x108] sm:$0xf]
    %v166 = vld [vmem:[%s1 + $0x10c] sm:$0xf]
    %v167 = vld [vmem:[%s1 + $0x110] sm:$0xf]
    %v168 = vld [vmem:[%s1 + $0x114] sm:$0xf]
    %v169 = vld [vmem:[%s1 + $0x118] sm:$0xf]
    %v170 = vld [vmem:[%s1 + $0x11c] sm:$0xf]
    %v171 = vld [vmem:[%s1 + $0x120] sm:$0xf]
    %v172 = vld [vmem:[%s1 + $0x124] sm:$0xf]
    %v173 = vld [vmem:[%s1 + $0x128] sm:$0xf]
    %v174 = vld [vmem:[%s1 + $0x12c] sm:$0xf]
    %v175 = vld [vmem:[%s1 + $0x130] sm:$0xf]
    %v176 = vld [vmem:[%s1 + $0x134] sm:$0xf]
    %v177 = vld [vmem:[%s1 + $0x138] sm:$0xf]
    %v178 = vld [vmem:[%s1 + $0x13c] sm:$0xf]
    %v179 = vld [vmem:[%s1 + $0x140] sm:$0xf]
    %v180 = vld [vmem:[%s1 + $0x144] sm:$0xf]
    %v181 = vld [vmem:[%s1 + $0x148] sm:$0xf]
    %v182 = vld [vmem:[%s1 + $0x14c] sm:$0xf]
    %v183 = vld [vmem:[%s1 + $0x150] sm:$0xf]
    %v184 = vld [vmem:[%s1 + $0x154] sm:$0xf]
    %v185 = vld [vmem:[%s1 + $0x158] sm:$0xf]
    %v186 = vld [vmem:[%s1 + $0x15c] sm:$0xf]
    %v187 = vld [vmem:[%s1 + $0x160] sm:$0xf]
    %v188 = vld [vmem:[%s1 + $0x164] sm:$0xf]
    %v189 = vld [vmem:[%s1 + $0x168] sm:$0xf]
    %v190 = vld [vmem:[%s1 + $0x16c] sm:$0xf]
    %v191 = vld [vmem:[%s1 + $0x170] sm:$0xf]
    %v192 = vld [vmem:[%s1 + $0x174] sm:$0xf]
    %v193 = vld [vmem:[%s1 + $0x178] sm:$0xf]
    %v194 = vld [vmem:[%s1 + $0x17c] sm:$0xf]
    %v195 = vld [vmem:[%s1 + $0x180] sm:$0xf]
    %v196 = vld [vmem:[%s1 + $0x184] sm:$0xf]
    %v197 = vld [vmem:[%s1 + $0x188] sm:$0xf]
    %v198 = vld [vmem:[%s1 + $0x18c] sm:$0xf]
    %v199 = vld [vmem:[%s1 + $0x190] sm:$0xf]
    %v200 = vld [vmem:[%s1 + $0x194] sm:$0xf]
    %v201 = vld [vmem:[%s1 + $0x198] sm:$0xf]
    %v202 = vld [vmem:[%s1 + $0x19c] sm:$0xf]
    %v203 = vld [vmem:[%s1 + $0x1a0] sm:$0xf]
    %v204 = vld [vmem:[%s1 + $0x1a4] sm:$0xf]
    %v205 = vld [vmem:[%s1 + $0x1a8] sm:$0xf]
    %v206 = vld [vmem:[%s1 + $0x1ac] sm:$0xf]
    %v207 = vld [vmem:[%s1 + $0x1b0] sm:$0xf]
    %v208 = vld [vmem:[%s1 + $0x1b4] sm:$0xf]
    %v209 = vld [vmem:[%s1 + $0x1b8] sm:$0xf]
    %v210 = vld [vmem:[%s1 + $0x1bc] sm:$0xf]
    %v211 = vld [vmem:[%s1 + $0x1c0] sm:$0xf]
    %v212 = vld [vmem:[%s1 + $0x1c4] sm:$0xf]
    %v213 = vld [vmem:[%s1 + $0x1c8] sm:$0xf]
    %v214 = vld [vmem:[%s1 + $0x1cc] sm:$0xf]
    %v215 = vld [vmem:[%s1 + $0x1d0] sm:$0xf]
    %v216 = vld [vmem:[%s1 + $0x1d4] sm:$0xf]
    %v217 = vld [vmem:[%s1 + $0x1d8] sm:$0xf]
    %v218 = vld [vmem:[%s1 + $0x1dc] sm:$0xf]
    %v219 = vld [vmem:[%s1 + $0x1e0] sm:$0xf]
    %v220 = vld [vmem:[%s1 + $0x1e4] sm:$0xf]
    %v221 = vld [vmem:[%s1 + $0x1e8] sm:$0xf]
    %v222 = vld [vmem:[%s1 + $0x1ec] sm:$0xf]
    %v223 = vld [vmem:[%s1 + $0x1f0] sm:$0xf]
    %v224 = vld [vmem:[%s1 + $0x1f4] sm:$0xf]
    %v225 = vld [vmem:[%s1 + $0x1f8] sm:$0xf]
    %v226 = vld [vmem:[%s1 + $0x1fc] sm:$0xf]
    %v227 = vld [vmem:[%s1 + $0x200] sm:$0xf]
    %v228 = vld [vmem:[%s1 + $0x204] sm:$0xf]
    %v229 = vld [vmem:[%s1 + $0x208] sm:$0xf]
    %v230 = vld [vmem:[%s1 + $0x20c] sm:$0xf]
    %v231 = vld [vmem:[%s1 + $0x210] sm:$0xf]
    %v232 = vld [vmem:[%s1 + $0x214] sm:$0xf]
    %v233 = vld [vmem:[%s1 + $0x218] sm:$0xf]
    %v234 = vld [vmem:[%s1 + $0x21c] sm:$0xf]
    %v235 = vld [vmem:[%s1 + $0x220] sm:$0xf]
    %v236 = vld [vmem:[%s1 + $0x224] sm:$0xf]
    %v237 = vld [vmem:[%s1 + $0x228] sm:$0xf]
    %v238 = vld [vmem:[%s1 + $0x22c] sm:$0xf]
    %v239 = vld [vmem:[%s1 + $0x230] sm:$0xf]
    %v240 = vld [vmem:[%s1 + $0x234] sm:$0xf]
    %v241 = vld [vmem:[%s1 + $0x238] sm:$0xf]
    %v242 = vld [vmem:[%s1 + $0x23c] sm:$0xf]
    %v323 = vunpack.c.l.b16 %v19
    %v324 = vunpack.c.h.b16 %v19
    %v325 = vunpack.c.l.b16 %v20
    %v326 = vunpack.c.h.b16 %v20
    %v327 = vunpack.c.l.b16 %v21
    %v328 = vunpack.c.h.b16 %v21
    %v329 = vunpack.c.l.b16 %v22
    %v330 = vunpack.c.h.b16 %v22
    %v331 = vunpack.c.l.b16 %v23
    %v332 = vunpack.c.l.b16 %v24
    %v333 = vunpack.c.h.b16 %v24
    %v334 = vunpack.c.l.b16 %v25
    %v335 = vunpack.c.h.b16 %v25
    %v336 = vunpack.c.l.b16 %v26
    %v337 = vunpack.c.h.b16 %v26
    %v338 = vunpack.c.l.b16 %v27
    %v339 = vunpack.c.h.b16 %v27
    %v340 = vunpack.c.l.b16 %v28
    %v341 = vunpack.c.l.b16 %v29
    %v342 = vunpack.c.h.b16 %v29
    %v343 = vunpack.c.l.b16 %v30
    %v344 = vunpack.c.h.b16 %v30
    %v345 = vunpack.c.l.b16 %v31
    %v346 = vunpack.c.h.b16 %v31
    %v347 = vunpack.c.l.b16 %v32
    %v348 = vunpack.c.h.b16 %v32
    %v349 = vunpack.c.l.b16 %v33
    %v350 = vunpack.c.l.b16 %v34
    %v351 = vunpack.c.h.b16 %v34
    %v352 = vunpack.c.l.b16 %v35
    %v353 = vunpack.c.h.b16 %v35
    %v354 = vunpack.c.l.b16 %v36
    %v355 = vunpack.c.h.b16 %v36
    %v356 = vunpack.c.l.b16 %v37
    %v357 = vunpack.c.h.b16 %v37
    %v358 = vunpack.c.l.b16 %v38
    %v359 = vunpack.c.l.b16 %v39
    %v360 = vunpack.c.h.b16 %v39
    %v361 = vunpack.c.l.b16 %v40
    %v362 = vunpack.c.h.b16 %v40
    %v363 = vunpack.c.l.b16 %v41
    %v364 = vunpack.c.h.b16 %v41
    %v365 = vunpack.c.l.b16 %v42
    %v366 = vunpack.c.h.b16 %v42
    %v367 = vunpack.c.l.b16 %v43
    %v368 = vunpack.c.l.b16 %v44
    %v369 = vunpack.c.h.b16 %v44
    %v370 = vunpack.c.l.b16 %v45
    %v371 = vunpack.c.h.b16 %v45
    %v372 = vunpack.c.l.b16 %v46
    %v373 = vunpack.c.h.b16 %v46
    %v374 = vunpack.c.l.b16 %v47
    %v375 = vunpack.c.h.b16 %v47
    %v376 = vunpack.c.l.b16 %v48
    %v377 = vunpack.c.l.b16 %v49
    %v378 = vunpack.c.h.b16 %v49
    %v379 = vunpack.c.l.b16 %v50
    %v380 = vunpack.c.h.b16 %v50
    %v381 = vunpack.c.l.b16 %v51
    %v382 = vunpack.c.h.b16 %v51
    %v383 = vunpack.c.l.b16 %v52
    %v384 = vunpack.c.h.b16 %v52
    %v385 = vunpack.c.l.b16 %v53
    %v386 = vunpack.c.l.b16 %v54
    %v387 = vunpack.c.h.b16 %v54
    %v388 = vunpack.c.l.b16 %v55
    %v389 = vunpack.c.h.b16 %v55
    %v390 = vunpack.c.l.b16 %v56
    %v391 = vunpack.c.h.b16 %v56
    %v392 = vunpack.c.l.b16 %v57
    %v393 = vunpack.c.h.b16 %v57
    %v394 = vunpack.c.l.b16 %v58
    %v395 = vunpack.c.l.b16 %v59
    %v396 = vunpack.c.h.b16 %v59
    %v397 = vunpack.c.l.b16 %v60
    %v398 = vunpack.c.h.b16 %v60
    %v399 = vunpack.c.l.b16 %v61
    %v400 = vunpack.c.h.b16 %v61
    %v401 = vunpack.c.l.b16 %v62
    %v402 = vunpack.c.h.b16 %v62
    %v403 = vunpack.c.l.b16 %v63
    %v404 = vunpack.c.l.b16 %v64
    %v405 = vunpack.c.h.b16 %v64
    %v406 = vunpack.c.l.b16 %v65
    %v407 = vunpack.c.h.b16 %v65
    %v408 = vunpack.c.l.b16 %v66
    %v409 = vunpack.c.h.b16 %v66
    %v410 = vunpack.c.l.b16 %v67
    %v411 = vunpack.c.h.b16 %v67
    %v412 = vunpack.c.l.b16 %v68
    %v413 = vunpack.c.l.b16 %v69
    %v414 = vunpack.c.h.b16 %v69
    %v415 = vunpack.c.l.b16 %v70
    %v416 = vunpack.c.h.b16 %v70
    %v417 = vunpack.c.l.b16 %v71
    %v418 = vunpack.c.h.b16 %v71
    %v419 = vunpack.c.l.b16 %v72
    %v420 = vunpack.c.h.b16 %v72
    %v421 = vunpack.c.l.b16 %v73
    %v422 = vunpack.c.l.b16 %v74
    %v423 = vunpack.c.h.b16 %v74
    %v424 = vunpack.c.l.b16 %v75
    %v425 = vunpack.c.h.b16 %v75
    %v426 = vunpack.c.l.b16 %v76
    %v427 = vunpack.c.h.b16 %v76
    %v428 = vunpack.c.l.b16 %v77
    %v429 = vunpack.c.h.b16 %v77
    %v430 = vunpack.c.l.b16 %v78
    %v431 = vunpack.c.l.b16 %v79
    %v432 = vunpack.c.h.b16 %v79
    %v433 = vunpack.c.l.b16 %v80
    %v434 = vunpack.c.h.b16 %v80
    %v435 = vunpack.c.l.b16 %v81
    %v436 = vunpack.c.h.b16 %v81
    %v437 = vunpack.c.l.b16 %v82
    %v438 = vunpack.c.h.b16 %v82
    %v439 = vunpack.c.l.b16 %v83
    %v440 = vunpack.c.l.b16 %v84
    %v441 = vunpack.c.h.b16 %v84
    %v442 = vunpack.c.l.b16 %v85
    %v443 = vunpack.c.h.b16 %v85
    %v444 = vunpack.c.l.b16 %v86
    %v445 = vunpack.c.h.b16 %v86
    %v446 = vunpack.c.l.b16 %v87
    %v447 = vunpack.c.h.b16 %v87
    %v448 = vunpack.c.l.b16 %v88
    %v449 = vunpack.c.l.b16 %v89
    %v450 = vunpack.c.h.b16 %v89
    %v451 = vunpack.c.l.b16 %v90
    %v452 = vunpack.c.h.b16 %v90
    %v453 = vunpack.c.l.b16 %v91
    %v454 = vunpack.c.h.b16 %v91
    %v455 = vunpack.c.l.b16 %v92
    %v456 = vunpack.c.h.b16 %v92
    %v457 = vunpack.c.l.b16 %v93
    %v458 = vunpack.c.l.b16 %v94
    %v459 = vunpack.c.h.b16 %v94
    %v460 = vunpack.c.l.b16 %v95
    %v461 = vunpack.c.h.b16 %v95
    %v462 = vunpack.c.l.b16 %v96
    %v463 = vunpack.c.h.b16 %v96
    %v464 = vunpack.c.l.b16 %v97
    %v465 = vunpack.c.h.b16 %v97
    %v466 = vunpack.c.l.b16 %v98
    %v467 = vpack.c.b16 %v332, %v323
    %v468 = vpack.c.b16 %v333, %v324
    %v469 = vpack.c.b16 %v334, %v325
    %v470 = vpack.c.b16 %v335, %v326
    %v471 = vpack.c.b16 %v336, %v327
    %v472 = vpack.c.b16 %v337, %v328
    %v473 = vpack.c.b16 %v338, %v329
    %v474 = vpack.c.b16 %v339, %v330
    %v475 = vpack.c.b16 %v340, %v331
    %v476 = vpack.c.b16 %v350, %v341
    %v477 = vpack.c.b16 %v351, %v342
    %v478 = vpack.c.b16 %v352, %v343
    %v479 = vpack.c.b16 %v353, %v344
    %v480 = vpack.c.b16 %v354, %v345
    %v481 = vpack.c.b16 %v355, %v346
    %v482 = vpack.c.b16 %v356, %v347
    %v483 = vpack.c.b16 %v357, %v348
    %v484 = vpack.c.b16 %v358, %v349
    %v485 = vpack.c.b16 %v368, %v359
    %v486 = vpack.c.b16 %v369, %v360
    %v487 = vpack.c.b16 %v370, %v361
    %v488 = vpack.c.b16 %v371, %v362
    %v489 = vpack.c.b16 %v372, %v363
    %v490 = vpack.c.b16 %v373, %v364
    %v491 = vpack.c.b16 %v374, %v365
    %v492 = vpack.c.b16 %v375, %v366
    %v493 = vpack.c.b16 %v376, %v367
    %v494 = vpack.c.b16 %v386, %v377
    %v495 = vpack.c.b16 %v387, %v378
    %v496 = vpack.c.b16 %v388, %v379
    %v497 = vpack.c.b16 %v389, %v380
    %v498 = vpack.c.b16 %v390, %v381
    %v499 = vpack.c.b16 %v391, %v382
    %v500 = vpack.c.b16 %v392, %v383
    %v501 = vpack.c.b16 %v393, %v384
    %v502 = vpack.c.b16 %v394, %v385
    %v503 = vpack.c.b16 %v404, %v395
    %v504 = vpack.c.b16 %v405, %v396
    %v505 = vpack.c.b16 %v406, %v397
    %v506 = vpack.c.b16 %v407, %v398
    %v507 = vpack.c.b16 %v408, %v399
    %v508 = vpack.c.b16 %v409, %v400
    %v509 = vpack.c.b16 %v410, %v401
    %v510 = vpack.c.b16 %v411, %v402
    %v511 = vpack.c.b16 %v412, %v403
    %v512 = vpack.c.b16 %v422, %v413
    %v513 = vpack.c.b16 %v423, %v414
    %v514 = vpack.c.b16 %v424, %v415
    %v515 = vpack.c.b16 %v425, %v416
    %v516 = vpack.c.b16 %v426, %v417
    %v517 = vpack.c.b16 %v427, %v418
    %v518 = vpack.c.b16 %v428, %v419
    %v519 = vpack.c.b16 %v429, %v420
    %v520 = vpack.c.b16 %v430, %v421
    %v521 = vpack.c.b16 %v440, %v431
    %v522 = vpack.c.b16 %v441, %v432
    %v523 = vpack.c.b16 %v442, %v433
    %v524 = vpack.c.b16 %v443, %v434
    %v525 = vpack.c.b16 %v444, %v435
    %v526 = vpack.c.b16 %v445, %v436
    %v527 = vpack.c.b16 %v446, %v437
    %v528 = vpack.c.b16 %v447, %v438
    %v529 = vpack.c.b16 %v448, %v439
    %v530 = vpack.c.b16 %v458, %v449
    %v531 = vpack.c.b16 %v459, %v450
    %v532 = vpack.c.b16 %v460, %v451
    %v533 = vpack.c.b16 %v461, %v452
    %v534 = vpack.c.b16 %v462, %v453
    %v535 = vpack.c.b16 %v463, %v454
    %v536 = vpack.c.b16 %v464, %v455
    %v537 = vpack.c.b16 %v465, %v456
    %v538 = vpack.c.b16 %v466, %v457
    %v755 = vunpack.c.l.b16 %v99
    %v756 = vunpack.c.l.b16 %v100
    %v757 = vunpack.c.l.b16 %v101
    %v758 = vunpack.c.l.b16 %v102
    %v759 = vunpack.c.l.b16 %v103
    %v760 = vunpack.c.l.b16 %v104
    %v761 = vunpack.c.l.b16 %v105
    %v762 = vunpack.c.l.b16 %v106
    %v763 = vunpack.c.l.b16 %v107
    %v764 = vunpack.c.l.b16 %v108
    %v765 = vunpack.c.l.b16 %v109
    %v766 = vunpack.c.l.b16 %v110
    %v767 = vunpack.c.l.b16 %v111
    %v768 = vunpack.c.l.b16 %v112
    %v769 = vunpack.c.l.b16 %v113
    %v770 = vunpack.c.l.b16 %v114
    %v771 = vunpack.c.l.b16 %v115
    %v772 = vunpack.c.l.b16 %v116
    %v773 = vunpack.c.l.b16 %v117
    %v774 = vunpack.c.l.b16 %v118
    %v775 = vunpack.c.l.b16 %v119
    %v776 = vunpack.c.l.b16 %v120
    %v777 = vunpack.c.l.b16 %v121
    %v778 = vunpack.c.l.b16 %v122
    %v779 = vunpack.c.l.b16 %v123
    %v780 = vunpack.c.l.b16 %v124
    %v781 = vunpack.c.l.b16 %v125
    %v782 = vunpack.c.l.b16 %v126
    %v783 = vunpack.c.l.b16 %v127
    %v784 = vunpack.c.l.b16 %v128
    %v785 = vunpack.c.l.b16 %v129
    %v786 = vunpack.c.l.b16 %v130
    %v787 = vunpack.c.l.b16 %v131
    %v788 = vunpack.c.l.b16 %v132
    %v789 = vunpack.c.l.b16 %v133
    %v790 = vunpack.c.l.b16 %v134
    %v791 = vunpack.c.l.b16 %v135
    %v792 = vunpack.c.l.b16 %v136
    %v793 = vunpack.c.l.b16 %v137
    %v794 = vunpack.c.l.b16 %v138
    %v795 = vunpack.c.l.b16 %v139
    %v796 = vunpack.c.l.b16 %v140
    %v797 = vunpack.c.l.b16 %v141
    %v798 = vunpack.c.l.b16 %v142
    %v799 = vunpack.c.l.b16 %v143
    %v800 = vunpack.c.l.b16 %v144
    %v801 = vunpack.c.l.b16 %v145
    %v802 = vunpack.c.l.b16 %v146
    %v803 = vunpack.c.l.b16 %v147
    %v804 = vunpack.c.l.b16 %v148
    %v805 = vunpack.c.l.b16 %v149
    %v806 = vunpack.c.l.b16 %v150
    %v807 = vunpack.c.l.b16 %v151
    %v808 = vunpack.c.l.b16 %v152
    %v809 = vunpack.c.l.b16 %v153
    %v810 = vunpack.c.l.b16 %v154
    %v811 = vunpack.c.l.b16 %v155
    %v812 = vunpack.c.l.b16 %v156
    %v813 = vunpack.c.l.b16 %v157
    %v814 = vunpack.c.l.b16 %v158
    %v815 = vunpack.c.l.b16 %v159
    %v816 = vunpack.c.l.b16 %v160
    %v817 = vunpack.c.l.b16 %v161
    %v818 = vunpack.c.l.b16 %v162
    %v819 = vunpack.c.l.b16 %v163
    %v820 = vunpack.c.l.b16 %v164
    %v821 = vunpack.c.l.b16 %v165
    %v822 = vunpack.c.l.b16 %v166
    %v823 = vunpack.c.l.b16 %v167
    %v824 = vunpack.c.l.b16 %v168
    %v825 = vunpack.c.l.b16 %v169
    %v826 = vunpack.c.l.b16 %v170
    %v827 = vunpack.c.l.b16 %v171
    %v828 = vunpack.c.l.b16 %v172
    %v829 = vunpack.c.l.b16 %v173
    %v830 = vunpack.c.l.b16 %v174
    %v831 = vunpack.c.l.b16 %v175
    %v832 = vunpack.c.l.b16 %v176
    %v833 = vunpack.c.l.b16 %v177
    %v834 = vunpack.c.l.b16 %v178
    %v835 = vunpack.c.l.b16 %v179
    %v836 = vunpack.c.l.b16 %v180
    %v837 = vunpack.c.l.b16 %v181
    %v838 = vunpack.c.l.b16 %v182
    %v839 = vunpack.c.l.b16 %v183
    %v840 = vunpack.c.l.b16 %v184
    %v841 = vunpack.c.l.b16 %v185
    %v842 = vunpack.c.l.b16 %v186
    %v843 = vunpack.c.l.b16 %v187
    %v844 = vunpack.c.l.b16 %v188
    %v845 = vunpack.c.l.b16 %v189
    %v846 = vunpack.c.l.b16 %v190
    %v847 = vunpack.c.l.b16 %v191
    %v848 = vunpack.c.l.b16 %v192
    %v849 = vunpack.c.l.b16 %v193
    %v850 = vunpack.c.l.b16 %v194
    %v851 = vunpack.c.l.b16 %v195
    %v852 = vunpack.c.l.b16 %v196
    %v853 = vunpack.c.l.b16 %v197
    %v854 = vunpack.c.l.b16 %v198
    %v855 = vunpack.c.l.b16 %v199
    %v856 = vunpack.c.l.b16 %v200
    %v857 = vunpack.c.l.b16 %v201
    %v858 = vunpack.c.l.b16 %v202
    %v859 = vunpack.c.l.b16 %v203
    %v860 = vunpack.c.l.b16 %v204
    %v861 = vunpack.c.l.b16 %v205
    %v862 = vunpack.c.l.b16 %v206
    %v863 = vunpack.c.l.b16 %v207
    %v864 = vunpack.c.l.b16 %v208
    %v865 = vunpack.c.l.b16 %v209
    %v866 = vunpack.c.l.b16 %v210
    %v867 = vunpack.c.l.b16 %v211
    %v868 = vunpack.c.l.b16 %v212
    %v869 = vunpack.c.l.b16 %v213
    %v870 = vunpack.c.l.b16 %v214
    %v871 = vunpack.c.l.b16 %v215
    %v872 = vunpack.c.l.b16 %v216
    %v873 = vunpack.c.l.b16 %v217
    %v874 = vunpack.c.l.b16 %v218
    %v875 = vunpack.c.l.b16 %v219
    %v876 = vunpack.c.l.b16 %v220
    %v877 = vunpack.c.l.b16 %v221
    %v878 = vunpack.c.l.b16 %v222
    %v879 = vunpack.c.l.b16 %v223
    %v880 = vunpack.c.l.b16 %v224
    %v881 = vunpack.c.l.b16 %v225
    %v882 = vunpack.c.l.b16 %v226
    %v883 = vunpack.c.l.b16 %v227
    %v884 = vunpack.c.l.b16 %v228
    %v885 = vunpack.c.l.b16 %v229
    %v886 = vunpack.c.l.b16 %v230
    %v887 = vunpack.c.l.b16 %v231
    %v888 = vunpack.c.l.b16 %v232
    %v889 = vunpack.c.l.b16 %v233
    %v890 = vunpack.c.l.b16 %v234
    %v891 = vunpack.c.l.b16 %v235
    %v892 = vunpack.c.l.b16 %v236
    %v893 = vunpack.c.l.b16 %v237
    %v894 = vunpack.c.l.b16 %v238
    %v895 = vunpack.c.l.b16 %v239
    %v896 = vunpack.c.l.b16 %v240
    %v897 = vunpack.c.l.b16 %v241
    %v898 = vunpack.c.l.b16 %v242
    %v899 = vpack.c.b16 %v756, %v755
    %v900 = vpack.c.b16 %v758, %v757
    %v901 = vpack.c.b16 %v760, %v759
    %v902 = vpack.c.b16 %v762, %v761
    %v903 = vpack.c.b16 %v764, %v763
    %v904 = vpack.c.b16 %v766, %v765
    %v905 = vpack.c.b16 %v768, %v767
    %v906 = vpack.c.b16 %v770, %v769
    %v907 = vpack.c.b16 %v772, %v771
    %v908 = vpack.c.b16 %v774, %v773
    %v909 = vpack.c.b16 %v776, %v775
    %v910 = vpack.c.b16 %v778, %v777
    %v911 = vpack.c.b16 %v780, %v779
    %v912 = vpack.c.b16 %v782, %v781
    %v913 = vpack.c.b16 %v784, %v783
    %v914 = vpack.c.b16 %v786, %v785
    %v915 = vpack.c.b16 %v788, %v787
    %v916 = vpack.c.b16 %v790, %v789
    %v917 = vpack.c.b16 %v792, %v791
    %v918 = vpack.c.b16 %v794, %v793
    %v919 = vpack.c.b16 %v796, %v795
    %v920 = vpack.c.b16 %v798, %v797
    %v921 = vpack.c.b16 %v800, %v799
    %v922 = vpack.c.b16 %v802, %v801
    %v923 = vpack.c.b16 %v804, %v803
    %v924 = vpack.c.b16 %v806, %v805
    %v925 = vpack.c.b16 %v808, %v807
    %v926 = vpack.c.b16 %v810, %v809
    %v927 = vpack.c.b16 %v812, %v811
    %v928 = vpack.c.b16 %v814, %v813
    %v929 = vpack.c.b16 %v816, %v815
    %v930 = vpack.c.b16 %v818, %v817
    %v931 = vpack.c.b16 %v820, %v819
    %v932 = vpack.c.b16 %v822, %v821
    %v933 = vpack.c.b16 %v824, %v823
    %v934 = vpack.c.b16 %v826, %v825
    %v935 = vpack.c.b16 %v828, %v827
    %v936 = vpack.c.b16 %v830, %v829
    %v937 = vpack.c.b16 %v832, %v831
    %v938 = vpack.c.b16 %v834, %v833
    %v939 = vpack.c.b16 %v836, %v835
    %v940 = vpack.c.b16 %v838, %v837
    %v941 = vpack.c.b16 %v840, %v839
    %v942 = vpack.c.b16 %v842, %v841
    %v943 = vpack.c.b16 %v844, %v843
    %v944 = vpack.c.b16 %v846, %v845
    %v945 = vpack.c.b16 %v848, %v847
    %v946 = vpack.c.b16 %v850, %v849
    %v947 = vpack.c.b16 %v852, %v851
    %v948 = vpack.c.b16 %v854, %v853
    %v949 = vpack.c.b16 %v856, %v855
    %v950 = vpack.c.b16 %v858, %v857
    %v951 = vpack.c.b16 %v860, %v859
    %v952 = vpack.c.b16 %v862, %v861
    %v953 = vpack.c.b16 %v864, %v863
    %v954 = vpack.c.b16 %v866, %v865
    %v955 = vpack.c.b16 %v868, %v867
    %v956 = vpack.c.b16 %v870, %v869
    %v957 = vpack.c.b16 %v872, %v871
    %v958 = vpack.c.b16 %v874, %v873
    %v959 = vpack.c.b16 %v876, %v875
    %v960 = vpack.c.b16 %v878, %v877
    %v961 = vpack.c.b16 %v880, %v879
    %v962 = vpack.c.b16 %v882, %v881
    %v963 = vpack.c.b16 %v884, %v883
    %v964 = vpack.c.b16 %v886, %v885
    %v965 = vpack.c.b16 %v888, %v887
    %v966 = vpack.c.b16 %v890, %v889
    %v967 = vpack.c.b16 %v892, %v891
    %v968 = vpack.c.b16 %v894, %v893
    %v969 = vpack.c.b16 %v896, %v895
    %v970 = vpack.c.b16 %v898, %v897
    %1043 = vmatprep.subr.bf16.mxu0 0
    %1044 = vmatpush1.bf16.msra.mxu0 %v899
    %1045 = vmatprep.subr.bf16.mxu0 0
    %1046 = vmatpush1.bf16.msra.mxu0 %v900
    %1047 = vmatprep.subr.bf16.mxu0 0
    %1048 = vmatpush1.bf16.msra.mxu0 %v901
    %1049 = vmatprep.subr.bf16.mxu0 0
    %1050 = vmatpush1.bf16.msra.mxu0 %v902
    %1051 = vmatprep.subr.bf16.mxu0 0
    %1052 = vmatpush1.bf16.msra.mxu0 %v903
    %1053 = vmatprep.subr.bf16.mxu0 0
    %1054 = vmatpush1.bf16.msra.mxu0 %v904
    %1055 = vmatprep.subr.bf16.mxu0 0
    %1056 = vmatpush1.bf16.msra.mxu0 %v905
    %1057 = vmatprep.subr.bf16.mxu0 0
    %1058 = vmatpush1.bf16.msra.mxu0 %v906
    %1059 = vmatprep.subr.bf16.mxu0 0
    %1060 = vmatpush1.bf16.msra.mxu0 %v907
    %1061 = vmatprep.subr.bf16.mxu0 0
    %1062 = vmatpush1.bf16.msra.mxu0 %v908
    %1063 = vmatprep.subr.bf16.mxu0 0
    %1064 = vmatpush1.bf16.msra.mxu0 %v909
    %1065 = vmatprep.subr.bf16.mxu0 0
    %1066 = vmatpush1.bf16.msra.mxu0 %v910
    %1067 = vmatprep.subr.bf16.mxu0 0
    %1068 = vmatpush1.bf16.msra.mxu0 %v911
    %1069 = vmatprep.subr.bf16.mxu0 0
    %1070 = vmatpush1.bf16.msra.mxu0 %v912
    %1071 = vmatprep.subr.bf16.mxu0 0
    %1072 = vmatpush1.bf16.msra.mxu0 %v913
    %1073 = vmatprep.subr.bf16.mxu0 0
    %1074 = vmatpush1.bf16.msra.mxu0 %v914
    %1075 = vmatprep.mubr.bf16.mxu0 %v468
    %1076 = vmatmul.mubr.bf16.gmra.mrb[0].mxu0 %v467
    %v1077 = vpop.f32.mrb[0].mxu0
    %v1078 = vadd.f32 0.0, %v1077
    %v1079 = vpop.f32.mrb[0].mxu0
    %v1080 = vpop.f32.mrb[0].mxu0
    %v1081 = vadd.f32 0.0, %v1080
    %v1082 = vpop.f32.mrb[0].mxu0
    %1083 = vmatprep.mubr.bf16.mxu0 %v477
    %1084 = vmatmul.mubr.bf16.gmra.mrb[0].mxu0 %v476
    %v1085 = vpop.f32.mrb[0].mxu0
    %v1086 = vadd.f32 0.0, %v1085
    %v1087 = vpop.f32.mrb[0].mxu0
    %v1088 = vpop.f32.mrb[0].mxu0
    %v1089 = vadd.f32 0.0, %v1088
    %v1090 = vpop.f32.mrb[0].mxu0
    %1091 = vmatprep.mubr.bf16.mxu0 %v486
    %1092 = vmatmul.mubr.bf16.gmra.mrb[0].mxu0 %v485
    %v1093 = vpop.f32.mrb[0].mxu0
    %v1094 = vadd.f32 0.0, %v1093
    %v1095 = vpop.f32.mrb[0].mxu0
    %v1096 = vpop.f32.mrb[0].mxu0
    %v1097 = vadd.f32 0.0, %v1096
    %v1098 = vpop.f32.mrb[0].mxu0
    %1099 = vmatprep.mubr.bf16.mxu0 %v495
    %1100 = vmatmul.mubr.bf16.gmra.mrb[0].mxu0 %v494
    %v1101 = vpop.f32.mrb[0].mxu0
    %v1102 = vadd.f32 0.0, %v1101
    %v1103 = vpop.f32.mrb[0].mxu0
    %v1104 = vpop.f32.mrb[0].mxu0
    %v1105 = vadd.f32 0.0, %v1104
    %v1106 = vpop.f32.mrb[0].mxu0
    %1107 = vmatprep.mubr.bf16.mxu0 %v504
    %1108 = vmatmul.mubr.bf16.gmra.mrb[0].mxu0 %v503
    %v1109 = vpop.f32.mrb[0].mxu0
    %v1110 = vadd.f32 0.0, %v1109
    %v1111 = vpop.f32.mrb[0].mxu0
    %v1112 = vpop.f32.mrb[0].mxu0
    %v1113 = vadd.f32 0.0, %v1112
    %v1114 = vpop.f32.mrb[0].mxu0
    %1115 = vmatprep.mubr.bf16.mxu0 %v513
    %1116 = vmatmul.mubr.bf16.gmra.mrb[0].mxu0 %v512
    %v1117 = vpop.f32.mrb[0].mxu0
    %v1118 = vadd.f32 0.0, %v1117
    %v1119 = vpop.f32.mrb[0].mxu0
    %v1120 = vpop.f32.mrb[0].mxu0
    %v1121 = vadd.f32 0.0, %v1120
    %v1122 = vpop.f32.mrb[0].mxu0
    %1123 = vmatprep.mubr.bf16.mxu0 %v522
    %1124 = vmatmul.mubr.bf16.gmra.mrb[0].mxu0 %v521
    %v1125 = vpop.f32.mrb[0].mxu0
    %v1126 = vadd.f32 0.0, %v1125
    %v1127 = vpop.f32.mrb[0].mxu0
    %v1128 = vpop.f32.mrb[0].mxu0
    %v1129 = vadd.f32 0.0, %v1128
    %v1130 = vpop.f32.mrb[0].mxu0
    %1131 = vmatprep.mubr.bf16.mxu0 %v531
    %1132 = vmatmul.mubr.bf16.gmra.mrb[0].mxu0 %v530
    %v1133 = vpop.f32.mrb[0].mxu0
    %v1134 = vadd.f32 0.0, %v1133
    %v1135 = vpop.f32.mrb[0].mxu0
    %v1136 = vpop.f32.mrb[0].mxu0
    %v1137 = vadd.f32 0.0, %v1136
    %v1138 = vpop.f32.mrb[0].mxu0
    %1139 = vdwg.mxu0
    %1140 = vmatprep.subr.bf16.mxu0 0
    %1141 = vmatpush1.bf16.msra.mxu0 %v915
    %1142 = vmatprep.subr.bf16.mxu0 0
    %1143 = vmatpush1.bf16.msra.mxu0 %v916
    %1144 = vmatprep.subr.bf16.mxu0 0
    %1145 = vmatpush1.bf16.msra.mxu0 %v917
    %1146 = vmatprep.subr.bf16.mxu0 0
    %1147 = vmatpush1.bf16.msra.mxu0 %v918
    %1148 = vmatprep.subr.bf16.mxu0 0
    %1149 = vmatpush1.bf16.msra.mxu0 %v919
    %1150 = vmatprep.subr.bf16.mxu0 0
    %1151 = vmatpush1.bf16.msra.mxu0 %v920
    %1152 = vmatprep.subr.bf16.mxu0 0
    %1153 = vmatpush1.bf16.msra.mxu0 %v921
    %1154 = vmatprep.subr.bf16.mxu0 0
    %1155 = vmatpush1.bf16.msra.mxu0 %v922
    %1156 = vmatprep.subr.bf16.mxu0 0
    %1157 = vmatpush1.bf16.msra.mxu0 %v923
    %1158 = vmatprep.subr.bf16.mxu0 0
    %1159 = vmatpush1.bf16.msra.mxu0 %v924
    %1160 = vmatprep.subr.bf16.mxu0 0
    %1161 = vmatpush1.bf16.msra.mxu0 %v925
    %1162 = vmatprep.subr.bf16.mxu0 0
    %1163 = vmatpush1.bf16.msra.mxu0 %v926
    %1164 = vmatprep.subr.bf16.mxu0 0
    %1165 = vmatpush1.bf16.msra.mxu0 %v927
    %1166 = vmatprep.subr.bf16.mxu0 0
    %1167 = vmatpush1.bf16.msra.mxu0 %v928
    %1168 = vmatprep.subr.bf16.mxu0 0
    %1169 = vmatpush1.bf16.msra.mxu0 %v929
    %1170 = vmatprep.subr.bf16.mxu0 0
    %1171 = vmatpush1.bf16.msra.mxu0 %v930
    %1172 = vmatprep.mubr.bf16.mxu0 %v470
    %1173 = vmatmul.mubr.bf16.gmra.mrb[0].mxu0 %v469
    %v1174 = vpop.f32.mrb[0].mxu0
    %v1175 = vadd.f32 %v1078, %v1174
    %v1176 = vpop.f32.mrb[0].mxu0
    %v1177 = vpop.f32.mrb[0].mxu0
    %v1178 = vadd.f32 %v1081, %v1177
    %v1179 = vpop.f32.mrb[0].mxu0
    %1180 = vmatprep.mubr.bf16.mxu0 %v479
    %1181 = vmatmul.mubr.bf16.gmra.mrb[0].mxu0 %v478
    %v1182 = vpop.f32.mrb[0].mxu0
    %v1183 = vadd.f32 %v1086, %v1182
    %v1184 = vpop.f32.mrb[0].mxu0
    %v1185 = vpop.f32.mrb[0].mxu0
    %v1186 = vadd.f32 %v1089, %v1185
    %v1187 = vpop.f32.mrb[0].mxu0
    %1188 = vmatprep.mubr.bf16.mxu0 %v488
    %1189 = vmatmul.mubr.bf16.gmra.mrb[0].mxu0 %v487
    %v1190 = vpop.f32.mrb[0].mxu0
    %v1191 = vadd.f32 %v1094, %v1190
    %v1192 = vpop.f32.mrb[0].mxu0
    %v1193 = vpop.f32.mrb[0].mxu0
    %v1194 = vadd.f32 %v1097, %v1193
    %v1195 = vpop.f32.mrb[0].mxu0
    %1196 = vmatprep.mubr.bf16.mxu0 %v497
    %1197 = vmatmul.mubr.bf16.gmra.mrb[0].mxu0 %v496
    %v1198 = vpop.f32.mrb[0].mxu0
    %v1199 = vadd.f32 %v1102, %v1198
    %v1200 = vpop.f32.mrb[0].mxu0
    %v1201 = vpop.f32.mrb[0].mxu0
    %v1202 = vadd.f32 %v1105, %v1201
    %v1203 = vpop.f32.mrb[0].mxu0
    %1204 = vmatprep.mubr.bf16.mxu0 %v506
    %1205 = vmatmul.mubr.bf16.gmra.mrb[0].mxu0 %v505
    %v1206 = vpop.f32.mrb[0].mxu0
    %v1207 = vadd.f32 %v1110, %v1206
    %v1208 = vpop.f32.mrb[0].mxu0
    %v1209 = vpop.f32.mrb[0].mxu0
    %v1210 = vadd.f32 %v1113, %v1209
    %v1211 = vpop.f32.mrb[0].mxu0
    %1212 = vmatprep.mubr.bf16.mxu0 %v515
    %1213 = vmatmul.mubr.bf16.gmra.mrb[0].mxu0 %v514
    %v1214 = vpop.f32.mrb[0].mxu0
    %v1215 = vadd.f32 %v1118, %v1214
    %v1216 = vpop.f32.mrb[0].mxu0
    %v1217 = vpop.f32.mrb[0].mxu0
    %v1218 = vadd.f32 %v1121, %v1217
    %v1219 = vpop.f32.mrb[0].mxu0
    %1220 = vmatprep.mubr.bf16.mxu0 %v524
    %1221 = vmatmul.mubr.bf16.gmra.mrb[0].mxu0 %v523
    %v1222 = vpop.f32.mrb[0].mxu0
    %v1223 = vadd.f32 %v1126, %v1222
    %v1224 = vpop.f32.mrb[0].mxu0
    %v1225 = vpop.f32.mrb[0].mxu0
    %v1226 = vadd.f32 %v1129, %v1225
    %v1227 = vpop.f32.mrb[0].mxu0
    %1228 = vmatprep.mubr.bf16.mxu0 %v533
    %1229 = vmatmul.mubr.bf16.gmra.mrb[0].mxu0 %v532
    %v1230 = vpop.f32.mrb[0].mxu0
    %v1231 = vadd.f32 %v1134, %v1230
    %v1232 = vpop.f32.mrb[0].mxu0
    %v1233 = vpop.f32.mrb[0].mxu0
    %v1234 = vadd.f32 %v1137, %v1233
    %v1235 = vpop.f32.mrb[0].mxu0
    %1236 = vdwg.mxu0
    %1237 = vmatprep.subr.bf16.mxu0 0
    %1238 = vmatpush1.bf16.msra.mxu0 %v931
    %1239 = vmatprep.subr.bf16.mxu0 0
    %1240 = vmatpush1.bf16.msra.mxu0 %v932
    %1241 = vmatprep.subr.bf16.mxu0 0
    %1242 = vmatpush1.bf16.msra.mxu0 %v933
    %1243 = vmatprep.subr.bf16.mxu0 0
    %1244 = vmatpush1.bf16.msra.mxu0 %v934
    %1245 = vmatprep.subr.bf16.mxu0 0
    %1246 = vmatpush1.bf16.msra.mxu0 %v935
    %1247 = vmatprep.subr.bf16.mxu0 0
    %1248 = vmatpush1.bf16.msra.mxu0 %v936
    %1249 = vmatprep.subr.bf16.mxu0 0
    %1250 = vmatpush1.bf16.msra.mxu0 %v937
    %1251 = vmatprep.subr.bf16.mxu0 0
    %1252 = vmatpush1.bf16.msra.mxu0 %v938
    %1253 = vmatprep.subr.bf16.mxu0 0
    %1254 = vmatpush1.bf16.msra.mxu0 %v939
    %1255 = vmatprep.subr.bf16.mxu0 0
    %1256 = vmatpush1.bf16.msra.mxu0 %v940
    %1257 = vmatprep.subr.bf16.mxu0 0
    %1258 = vmatpush1.bf16.msra.mxu0 %v941
    %1259 = vmatprep.subr.bf16.mxu0 0
    %1260 = vmatpush1.bf16.msra.mxu0 %v942
    %1261 = vmatprep.subr.bf16.mxu0 0
    %1262 = vmatpush1.bf16.msra.mxu0 %v943
    %1263 = vmatprep.subr.bf16.mxu0 0
    %1264 = vmatpush1.bf16.msra.mxu0 %v944
    %1265 = vmatprep.subr.bf16.mxu0 0
    %1266 = vmatpush1.bf16.msra.mxu0 %v945
    %1267 = vmatprep.subr.bf16.mxu0 0
    %1268 = vmatpush1.bf16.msra.mxu0 %v946
    %1269 = vmatprep.mubr.bf16.mxu0 %v472
    %1270 = vmatmul.mubr.bf16.gmra.mrb[0].mxu0 %v471
    %v1271 = vpop.f32.mrb[0].mxu0
    %v1272 = vadd.f32 %v1175, %v1271
    %v1273 = vpop.f32.mrb[0].mxu0
    %v1274 = vpop.f32.mrb[0].mxu0
    %v1275 = vadd.f32 %v1178, %v1274
    %v1276 = vpop.f32.mrb[0].mxu0
    %1277 = vmatprep.mubr.bf16.mxu0 %v481
    %1278 = vmatmul.mubr.bf16.gmra.mrb[0].mxu0 %v480
    %v1279 = vpop.f32.mrb[0].mxu0
    %v1280 = vadd.f32 %v1183, %v1279
    %v1281 = vpop.f32.mrb[0].mxu0
    %v1282 = vpop.f32.mrb[0].mxu0
    %v1283 = vadd.f32 %v1186, %v1282
    %v1284 = vpop.f32.mrb[0].mxu0
    %1285 = vmatprep.mubr.bf16.mxu0 %v490
    %1286 = vmatmul.mubr.bf16.gmra.mrb[0].mxu0 %v489
    %v1287 = vpop.f32.mrb[0].mxu0
    %v1288 = vadd.f32 %v1191, %v1287
    %v1289 = vpop.f32.mrb[0].mxu0
    %v1290 = vpop.f32.mrb[0].mxu0
    %v1291 = vadd.f32 %v1194, %v1290
    %v1292 = vpop.f32.mrb[0].mxu0
    %1293 = vmatprep.mubr.bf16.mxu0 %v499
    %1294 = vmatmul.mubr.bf16.gmra.mrb[0].mxu0 %v498
    %v1295 = vpop.f32.mrb[0].mxu0
    %v1296 = vadd.f32 %v1199, %v1295
    %v1297 = vpop.f32.mrb[0].mxu0
    %v1298 = vpop.f32.mrb[0].mxu0
    %v1299 = vadd.f32 %v1202, %v1298
    %v1300 = vpop.f32.mrb[0].mxu0
    %1301 = vmatprep.mubr.bf16.mxu0 %v508
    %1302 = vmatmul.mubr.bf16.gmra.mrb[0].mxu0 %v507
    %v1303 = vpop.f32.mrb[0].mxu0
    %v1304 = vadd.f32 %v1207, %v1303
    %v1305 = vpop.f32.mrb[0].mxu0
    %v1306 = vpop.f32.mrb[0].mxu0
    %v1307 = vadd.f32 %v1210, %v1306
    %v1308 = vpop.f32.mrb[0].mxu0
    %1309 = vmatprep.mubr.bf16.mxu0 %v517
    %1310 = vmatmul.mubr.bf16.gmra.mrb[0].mxu0 %v516
    %v1311 = vpop.f32.mrb[0].mxu0
    %v1312 = vadd.f32 %v1215, %v1311
    %v1313 = vpop.f32.mrb[0].mxu0
    %v1314 = vpop.f32.mrb[0].mxu0
    %v1315 = vadd.f32 %v1218, %v1314
    %v1316 = vpop.f32.mrb[0].mxu0
    %1317 = vmatprep.mubr.bf16.mxu0 %v526
    %1318 = vmatmul.mubr.bf16.gmra.mrb[0].mxu0 %v525
    %v1319 = vpop.f32.mrb[0].mxu0
    %v1320 = vadd.f32 %v1223, %v1319
    %v1321 = vpop.f32.mrb[0].mxu0
    %v1322 = vpop.f32.mrb[0].mxu0
    %v1323 = vadd.f32 %v1226, %v1322
    %v1324 = vpop.f32.mrb[0].mxu0
    %1325 = vmatprep.mubr.bf16.mxu0 %v535
    %1326 = vmatmul.mubr.bf16.gmra.mrb[0].mxu0 %v534
    %v1327 = vpop.f32.mrb[0].mxu0
    %v1328 = vadd.f32 %v1231, %v1327
    %v1329 = vpop.f32.mrb[0].mxu0
    %v1330 = vpop.f32.mrb[0].mxu0
    %v1331 = vadd.f32 %v1234, %v1330
    %v1332 = vpop.f32.mrb[0].mxu0
    %1333 = vdwg.mxu0
    %1334 = vmatprep.subr.bf16.mxu0 0
    %1335 = vmatpush1.bf16.msra.mxu0 %v947
    %1336 = vmatprep.subr.bf16.mxu0 0
    %1337 = vmatpush1.bf16.msra.mxu0 %v948
    %1338 = vmatprep.subr.bf16.mxu0 0
    %1339 = vmatpush1.bf16.msra.mxu0 %v949
    %1340 = vmatprep.subr.bf16.mxu0 0
    %1341 = vmatpush1.bf16.msra.mxu0 %v950
    %1342 = vmatprep.subr.bf16.mxu0 0
    %1343 = vmatpush1.bf16.msra.mxu0 %v951
    %1344 = vmatprep.subr.bf16.mxu0 0
    %1345 = vmatpush1.bf16.msra.mxu0 %v952
    %1346 = vmatprep.subr.bf16.mxu0 0
    %1347 = vmatpush1.bf16.msra.mxu0 %v953
    %1348 = vmatprep.subr.bf16.mxu0 0
    %1349 = vmatpush1.bf16.msra.mxu0 %v954
    %1350 = vmatprep.subr.bf16.mxu0 0
    %1351 = vmatpush1.bf16.msra.mxu0 %v955
    %1352 = vmatprep.subr.bf16.mxu0 0
    %1353 = vmatpush1.bf16.msra.mxu0 %v956
    %1354 = vmatprep.subr.bf16.mxu0 0
    %1355 = vmatpush1.bf16.msra.mxu0 %v957
    %1356 = vmatprep.subr.bf16.mxu0 0
    %1357 = vmatpush1.bf16.msra.mxu0 %v958
    %1358 = vmatprep.subr.bf16.mxu0 0
    %1359 = vmatpush1.bf16.msra.mxu0 %v959
    %1360 = vmatprep.subr.bf16.mxu0 0
    %1361 = vmatpush1.bf16.msra.mxu0 %v960
    %1362 = vmatprep.subr.bf16.mxu0 0
    %1363 = vmatpush1.bf16.msra.mxu0 %v961
    %1364 = vmatprep.subr.bf16.mxu0 0
    %1365 = vmatpush1.bf16.msra.mxu0 %v962
    %1366 = vmatprep.mubr.bf16.mxu0 %v474
    %1367 = vmatmul.mubr.bf16.gmra.mrb[0].mxu0 %v473
    %v1368 = vpop.f32.mrb[0].mxu0
    %v1369 = vadd.f32 %v1272, %v1368
    %v1370 = vpop.f32.mrb[0].mxu0
    %v1371 = vpop.f32.mrb[0].mxu0
    %v1372 = vadd.f32 %v1275, %v1371
    %v1373 = vpop.f32.mrb[0].mxu0
    %1374 = vmatprep.mubr.bf16.mxu0 %v483
    %1375 = vmatmul.mubr.bf16.gmra.mrb[0].mxu0 %v482
    %v1376 = vpop.f32.mrb[0].mxu0
    %v1377 = vadd.f32 %v1280, %v1376
    %v1378 = vpop.f32.mrb[0].mxu0
    %v1379 = vpop.f32.mrb[0].mxu0
    %v1380 = vadd.f32 %v1283, %v1379
    %v1381 = vpop.f32.mrb[0].mxu0
    %1382 = vmatprep.mubr.bf16.mxu0 %v492
    %1383 = vmatmul.mubr.bf16.gmra.mrb[0].mxu0 %v491
    %v1384 = vpop.f32.mrb[0].mxu0
    %v1385 = vadd.f32 %v1288, %v1384
    %v1386 = vpop.f32.mrb[0].mxu0
    %v1387 = vpop.f32.mrb[0].mxu0
    %v1388 = vadd.f32 %v1291, %v1387
    %v1389 = vpop.f32.mrb[0].mxu0
    %1390 = vmatprep.mubr.bf16.mxu0 %v501
    %1391 = vmatmul.mubr.bf16.gmra.mrb[0].mxu0 %v500
    %v1392 = vpop.f32.mrb[0].mxu0
    %v1393 = vadd.f32 %v1296, %v1392
    %v1394 = vpop.f32.mrb[0].mxu0
    %v1395 = vpop.f32.mrb[0].mxu0
    %v1396 = vadd.f32 %v1299, %v1395
    %v1397 = vpop.f32.mrb[0].mxu0
    %1398 = vmatprep.mubr.bf16.mxu0 %v510
    %1399 = vmatmul.mubr.bf16.gmra.mrb[0].mxu0 %v509
    %v1400 = vpop.f32.mrb[0].mxu0
    %v1401 = vadd.f32 %v1304, %v1400
    %v1402 = vpop.f32.mrb[0].mxu0
    %v1403 = vpop.f32.mrb[0].mxu0
    %v1404 = vadd.f32 %v1307, %v1403
    %v1405 = vpop.f32.mrb[0].mxu0
    %1406 = vmatprep.mubr.bf16.mxu0 %v519
    %1407 = vmatmul.mubr.bf16.gmra.mrb[0].mxu0 %v518
    %v1408 = vpop.f32.mrb[0].mxu0
    %v1409 = vadd.f32 %v1312, %v1408
    %v1410 = vpop.f32.mrb[0].mxu0
    %v1411 = vpop.f32.mrb[0].mxu0
    %v1412 = vadd.f32 %v1315, %v1411
    %v1413 = vpop.f32.mrb[0].mxu0
    %1414 = vmatprep.mubr.bf16.mxu0 %v528
    %1415 = vmatmul.mubr.bf16.gmra.mrb[0].mxu0 %v527
    %v1416 = vpop.f32.mrb[0].mxu0
    %v1417 = vadd.f32 %v1320, %v1416
    %v1418 = vpop.f32.mrb[0].mxu0
    %v1419 = vpop.f32.mrb[0].mxu0
    %v1420 = vadd.f32 %v1323, %v1419
    %v1421 = vpop.f32.mrb[0].mxu0
    %1422 = vmatprep.mubr.bf16.mxu0 %v537
    %1423 = vmatmul.mubr.bf16.gmra.mrb[0].mxu0 %v536
    %v1424 = vpop.f32.mrb[0].mxu0
    %v1425 = vadd.f32 %v1328, %v1424
    %v1426 = vpop.f32.mrb[0].mxu0
    %v1427 = vpop.f32.mrb[0].mxu0
    %v1428 = vadd.f32 %v1331, %v1427
    %v1429 = vpop.f32.mrb[0].mxu0
    %1430 = vdwg.mxu0
    %1431 = vmatprep.subr.bf16.mxu0 0
    %1432 = vmatpush1.bf16.msra.mxu0 %v963
    %1433 = vmatprep.subr.bf16.mxu0 0
    %1434 = vmatpush1.bf16.msra.mxu0 %v964
    %1435 = vmatprep.subr.bf16.mxu0 0
    %1436 = vmatpush1.bf16.msra.mxu0 %v965
    %1437 = vmatprep.subr.bf16.mxu0 0
    %1438 = vmatpush1.bf16.msra.mxu0 %v966
    %1439 = vmatprep.subr.bf16.mxu0 0
    %1440 = vmatpush1.bf16.msra.mxu0 %v967
    %1441 = vmatprep.subr.bf16.mxu0 0
    %1442 = vmatpush1.bf16.msra.mxu0 %v968
    %1443 = vmatprep.subr.bf16.mxu0 0
    %1444 = vmatpush1.bf16.msra.mxu0 %v969
    %1445 = vmatprep.subr.bf16.mxu0 0
    %1446 = vmatpush1.bf16.msra.mxu0 %v970
    %1447 = vmatprep.subr.bf16.mxu0 0
    %1448 = vmatpush1.bf16.msra.mxu0 0
    %1449 = vmatprep.subr.bf16.mxu0 0
    %1450 = vmatpush1.bf16.msra.mxu0 0
    %1451 = vmatprep.subr.bf16.mxu0 0
    %1452 = vmatpush1.bf16.msra.mxu0 0
    %1453 = vmatprep.subr.bf16.mxu0 0
    %1454 = vmatpush1.bf16.msra.mxu0 0
    %1455 = vmatprep.subr.bf16.mxu0 0
    %1456 = vmatpush1.bf16.msra.mxu0 0
    %1457 = vmatprep.subr.bf16.mxu0 0
    %1458 = vmatpush1.bf16.msra.mxu0 0
    %1459 = vmatprep.subr.bf16.mxu0 0
    %1460 = vmatpush1.bf16.msra.mxu0 0
    %1461 = vmatprep.subr.bf16.mxu0 0
    %1462 = vmatpush1.bf16.msra.mxu0 0
    %1463 = vmatprep.mubr.bf16.mxu0 0
    %1464 = vmatmul.mubr.bf16.gmra.mrb[0].mxu0 %v475
    %v1465 = vpop.f32.mrb[0].mxu0
    %v1466 = vadd.f32 %v1369, %v1465
    %v1467 = vpop.f32.mrb[0].mxu0
    %v1468 = vpop.f32.mrb[0].mxu0
    %v1469 = vadd.f32 %v1372, %v1468
    %v1470 = vpop.f32.mrb[0].mxu0
    %1471 = vmatprep.mubr.bf16.mxu0 0
    %1472 = vmatmul.mubr.bf16.gmra.mrb[0].mxu0 %v484
    %v1473 = vpop.f32.mrb[0].mxu0
    %v1474 = vadd.f32 %v1377, %v1473
    %v1475 = vpop.f32.mrb[0].mxu0
    %v1476 = vpop.f32.mrb[0].mxu0
    %v1477 = vadd.f32 %v1380, %v1476
    %v1478 = vpop.f32.mrb[0].mxu0
    %1479 = vmatprep.mubr.bf16.mxu0 0
    %1480 = vmatmul.mubr.bf16.gmra.mrb[0].mxu0 %v493
    %v1481 = vpop.f32.mrb[0].mxu0
    %v1482 = vadd.f32 %v1385, %v1481
    %v1483 = vpop.f32.mrb[0].mxu0
    %v1484 = vpop.f32.mrb[0].mxu0
    %v1485 = vadd.f32 %v1388, %v1484
    %v1486 = vpop.f32.mrb[0].mxu0
    %1487 = vmatprep.mubr.bf16.mxu0 0
    %1488 = vmatmul.mubr.bf16.gmra.mrb[0].mxu0 %v502
    %v1489 = vpop.f32.mrb[0].mxu0
    %v1490 = vadd.f32 %v1393, %v1489
    %v1491 = vpop.f32.mrb[0].mxu0
    %v1492 = vpop.f32.mrb[0].mxu0
    %v1493 = vadd.f32 %v1396, %v1492
    %v1494 = vpop.f32.mrb[0].mxu0
    %1495 = vmatprep.mubr.bf16.mxu0 0
    %1496 = vmatmul.mubr.bf16.gmra.mrb[0].mxu0 %v511
    %v1497 = vpop.f32.mrb[0].mxu0
    %v1498 = vadd.f32 %v1401, %v1497
    %v1499 = vpop.f32.mrb[0].mxu0
    %v1500 = vpop.f32.mrb[0].mxu0
    %v1501 = vadd.f32 %v1404, %v1500
    %v1502 = vpop.f32.mrb[0].mxu0
    %1503 = vmatprep.mubr.bf16.mxu0 0
    %1504 = vmatmul.mubr.bf16.gmra.mrb[0].mxu0 %v520
    %v1505 = vpop.f32.mrb[0].mxu0
    %v1506 = vadd.f32 %v1409, %v1505
    %v1507 = vpop.f32.mrb[0].mxu0
    %v1508 = vpop.f32.mrb[0].mxu0
    %v1509 = vadd.f32 %v1412, %v1508
    %v1510 = vpop.f32.mrb[0].mxu0
    %1511 = vmatprep.mubr.bf16.mxu0 0
    %1512 = vmatmul.mubr.bf16.gmra.mrb[0].mxu0 %v529
    %v1513 = vpop.f32.mrb[0].mxu0
    %v1514 = vadd.f32 %v1417, %v1513
    %v1515 = vpop.f32.mrb[0].mxu0
    %v1516 = vpop.f32.mrb[0].mxu0
    %v1517 = vadd.f32 %v1420, %v1516
    %v1518 = vpop.f32.mrb[0].mxu0
    %1519 = vmatprep.mubr.bf16.mxu0 0
    %1520 = vmatmul.mubr.bf16.gmra.mrb[0].mxu0 %v538
    %v1521 = vpop.f32.mrb[0].mxu0
    %v1522 = vadd.f32 %v1425, %v1521
    %v1523 = vpop.f32.mrb[0].mxu0
    %v1524 = vpop.f32.mrb[0].mxu0
    %v1525 = vadd.f32 %v1428, %v1524
    %v1526 = vpop.f32.mrb[0].mxu0
    %1527 = vdwg.mxu0
    %v1528 = vmax.f32 %v1466, 0.0
    %v1529 = vmax.f32 %v1469, 0.0
    %v1530 = vmax.f32 %v1474, 0.0
    %v1531 = vmax.f32 %v1477, 0.0
    %v1532 = vmax.f32 %v1482, 0.0
    %v1533 = vmax.f32 %v1485, 0.0
    %v1534 = vmax.f32 %v1490, 0.0
    %v1535 = vmax.f32 %v1493, 0.0
    %v1536 = vmax.f32 %v1498, 0.0
    %v1537 = vmax.f32 %v1501, 0.0
    %v1538 = vmax.f32 %v1506, 0.0
    %v1539 = vmax.f32 %v1509, 0.0
    %v1540 = vmax.f32 %v1514, 0.0
    %v1541 = vmax.f32 %v1517, 0.0
    %v1542 = vmax.f32 %v1522, 0.0
    %v1543 = vmax.f32 %v1525, 0.0
    %v1544 = vpack.c.bf16 %v1529, %v1528
    %v1545 = vpack.c.bf16 %v1531, %v1530
    %v1546 = vpack.c.bf16 %v1533, %v1532
    %v1547 = vpack.c.bf16 %v1535, %v1534
    %v1548 = vpack.c.bf16 %v1537, %v1536
    %v1549 = vpack.c.bf16 %v1539, %v1538
    %v1550 = vpack.c.bf16 %v1541, %v1540
    %v1551 = vpack.c.bf16 %v1543, %v1542
    %v1552 = vld [vmem:[%s2] sm:$0xf]
    %v1553 = vld [vmem:[%s2 + $0x4] sm:$0xf]
    %v1554 = vld [vmem:[%s2 + $0x8] sm:$0xf]
    %v1555 = vld [vmem:[%s2 + $0xc] sm:$0xf]
    %v1556 = vld [vmem:[%s2 + $0x10] sm:$0xf]
    %v1557 = vld [vmem:[%s2 + $0x14] sm:$0xf]
    %v1558 = vld [vmem:[%s2 + $0x18] sm:$0xf]
    %v1559 = vld [vmem:[%s2 + $0x1c] sm:$0xf]
    %v1560 = vld [vmem:[%s2 + $0x20] sm:$0xf]
    %v1561 = vld [vmem:[%s2 + $0x24] sm:$0xf]
    %v1562 = vld [vmem:[%s2 + $0x28] sm:$0xf]
    %v1563 = vld [vmem:[%s2 + $0x2c] sm:$0xf]
    %v1564 = vld [vmem:[%s2 + $0x30] sm:$0xf]
    %v1565 = vld [vmem:[%s2 + $0x34] sm:$0xf]
    %v1566 = vld [vmem:[%s2 + $0x38] sm:$0xf]
    %v1567 = vld [vmem:[%s2 + $0x3c] sm:$0xf]
    %v1568 = vld [vmem:[%s3] sm:$0xff]
    %v1569 = vld [vmem:[%s3 + $0x8] sm:$0xff]
    %v1570 = vld [vmem:[%s3 + $0x10] sm:$0xff]
    %v1571 = vld [vmem:[%s3 + $0x18] sm:$0xff]
    %v1572 = vld [vmem:[%s3 + $0x20] sm:$0xff]
    %v1573 = vld [vmem:[%s3 + $0x28] sm:$0xff]
    %v1574 = vld [vmem:[%s3 + $0x30] sm:$0xff]
    %v1575 = vld [vmem:[%s3 + $0x38] sm:$0xff]
    %v1576 = vld [vmem:[%s3 + $0x40] sm:$0xff]
    %v1577 = vld [vmem:[%s3 + $0x48] sm:$0xff]
    %v1578 = vld [vmem:[%s3 + $0x50] sm:$0xff]
    %v1579 = vld [vmem:[%s3 + $0x58] sm:$0xff]
    %v1580 = vld [vmem:[%s3 + $0x60] sm:$0xff]
    %v1581 = vld [vmem:[%s3 + $0x68] sm:$0xff]
    %v1582 = vld [vmem:[%s3 + $0x70] sm:$0xff]
    %v1583 = vld [vmem:[%s3 + $0x78] sm:$0xff]
    %v1600 = vunpack.c.l.b16 %v1552
    %v1601 = vunpack.c.l.b16 %v1553
    %v1602 = vunpack.c.l.b16 %v1554
    %v1603 = vunpack.c.l.b16 %v1555
    %v1604 = vunpack.c.l.b16 %v1556
    %v1605 = vunpack.c.l.b16 %v1557
    %v1606 = vunpack.c.l.b16 %v1558
    %v1607 = vunpack.c.l.b16 %v1559
    %v1608 = vunpack.c.l.b16 %v1560
    %v1609 = vunpack.c.l.b16 %v1561
    %v1610 = vunpack.c.l.b16 %v1562
    %v1611 = vunpack.c.l.b16 %v1563
    %v1612 = vunpack.c.l.b16 %v1564
    %v1613 = vunpack.c.l.b16 %v1565
    %v1614 = vunpack.c.l.b16 %v1566
    %v1615 = vunpack.c.l.b16 %v1567
    %v1616 = vpack.c.b16 %v1601, %v1600
    %v1617 = vpack.c.b16 %v1603, %v1602
    %v1618 = vpack.c.b16 %v1605, %v1604
    %v1619 = vpack.c.b16 %v1607, %v1606
    %v1620 = vpack.c.b16 %v1609, %v1608
    %v1621 = vpack.c.b16 %v1611, %v1610
    %v1622 = vpack.c.b16 %v1613, %v1612
    %v1623 = vpack.c.b16 %v1615, %v1614
    %1632 = vmatprep.subr.bf16.mxu0 0
    %1633 = vmatpush1.bf16.msra.mxu0 %v1616
    %1634 = vmatprep.subr.bf16.mxu0 0
    %1635 = vmatpush1.bf16.msra.mxu0 %v1617
    %1636 = vmatprep.subr.bf16.mxu0 0
    %1637 = vmatpush1.bf16.msra.mxu0 %v1618
    %1638 = vmatprep.subr.bf16.mxu0 0
    %1639 = vmatpush1.bf16.msra.mxu0 %v1619
    %1640 = vmatprep.subr.bf16.mxu0 0
    %1641 = vmatpush1.bf16.msra.mxu0 %v1620
    %1642 = vmatprep.subr.bf16.mxu0 0
    %1643 = vmatpush1.bf16.msra.mxu0 %v1621
    %1644 = vmatprep.subr.bf16.mxu0 0
    %1645 = vmatpush1.bf16.msra.mxu0 %v1622
    %1646 = vmatprep.subr.bf16.mxu0 0
    %1647 = vmatpush1.bf16.msra.mxu0 %v1623
    %1648 = vmatprep.subr.bf16.mxu0 0
    %1649 = vmatpush1.bf16.msra.mxu0 0
    %1650 = vmatprep.subr.bf16.mxu0 0
    %1651 = vmatpush1.bf16.msra.mxu0 0
    %1652 = vmatprep.subr.bf16.mxu0 0
    %1653 = vmatpush1.bf16.msra.mxu0 0
    %1654 = vmatprep.subr.bf16.mxu0 0
    %1655 = vmatpush1.bf16.msra.mxu0 0
    %1656 = vmatprep.subr.bf16.mxu0 0
    %1657 = vmatpush1.bf16.msra.mxu0 0
    %1658 = vmatprep.subr.bf16.mxu0 0
    %1659 = vmatpush1.bf16.msra.mxu0 0
    %1660 = vmatprep.subr.bf16.mxu0 0
    %1661 = vmatpush1.bf16.msra.mxu0 0
    %1662 = vmatprep.subr.bf16.mxu0 0
    %1663 = vmatpush1.bf16.msra.mxu0 0
    %1664 = vmatprep.mubr.bf16.mxu0 0
    %1665 = vmatmul.mubr.bf16.gmra.mrb[0].mxu0 %v1544
    %v1666 = vpop.f32.mrb[0].mxu0
    %v1667 = vadd.f32 %v1568, %v1666
    %v1668 = vpop.f32.mrb[0].mxu0
    %v1669 = vpop.f32.mrb[0].mxu0
    %v1670 = vadd.f32 %v1569, %v1669
    %v1671 = vpop.f32.mrb[0].mxu0
    %1672 = vmatprep.mubr.bf16.mxu0 0
    %1673 = vmatmul.mubr.bf16.gmra.mrb[0].mxu0 %v1545
    %v1674 = vpop.f32.mrb[0].mxu0
    %v1675 = vadd.f32 %v1570, %v1674
    %v1676 = vpop.f32.mrb[0].mxu0
    %v1677 = vpop.f32.mrb[0].mxu0
    %v1678 = vadd.f32 %v1571, %v1677
    %v1679 = vpop.f32.mrb[0].mxu0
    %1680 = vmatprep.mubr.bf16.mxu0 0
    %1681 = vmatmul.mubr.bf16.gmra.mrb[0].mxu0 %v1546
    %v1682 = vpop.f32.mrb[0].mxu0
    %v1683 = vadd.f32 %v1572, %v1682
    %v1684 = vpop.f32.mrb[0].mxu0
    %v1685 = vpop.f32.mrb[0].mxu0
    %v1686 = vadd.f32 %v1573, %v1685
    %v1687 = vpop.f32.mrb[0].mxu0
    %1688 = vmatprep.mubr.bf16.mxu0 0
    %1689 = vmatmul.mubr.bf16.gmra.mrb[0].mxu0 %v1547
    %v1690 = vpop.f32.mrb[0].mxu0
    %v1691 = vadd.f32 %v1574, %v1690
    %v1692 = vpop.f32.mrb[0].mxu0
    %v1693 = vpop.f32.mrb[0].mxu0
    %v1694 = vadd.f32 %v1575, %v1693
    %v1695 = vpop.f32.mrb[0].mxu0
    %1696 = vmatprep.mubr.bf16.mxu0 0
    %1697 = vmatmul.mubr.bf16.gmra.mrb[0].mxu0 %v1548
    %v1698 = vpop.f32.mrb[0].mxu0
    %v1699 = vadd.f32 %v1576, %v1698
    %v1700 = vpop.f32.mrb[0].mxu0
    %v1701 = vpop.f32.mrb[0].mxu0
    %v1702 = vadd.f32 %v1577, %v1701
    %v1703 = vpop.f32.mrb[0].mxu0
    %1704 = vmatprep.mubr.bf16.mxu0 0
    %1705 = vmatmul.mubr.bf16.gmra.mrb[0].mxu0 %v1549
    %v1706 = vpop.f32.mrb[0].mxu0
    %v1707 = vadd.f32 %v1578, %v1706
    %v1708 = vpop.f32.mrb[0].mxu0
    %v1709 = vpop.f32.mrb[0].mxu0
    %v1710 = vadd.f32 %v1579, %v1709
    %v1711 = vpop.f32.mrb[0].mxu0
    %1712 = vmatprep.mubr.bf16.mxu0 0
    %1713 = vmatmul.mubr.bf16.gmra.mrb[0].mxu0 %v1550
    %v1714 = vpop.f32.mrb[0].mxu0
    %v1715 = vadd.f32 %v1580, %v1714
    %v1716 = vpop.f32.mrb[0].mxu0
    %v1717 = vpop.f32.mrb[0].mxu0
    %v1718 = vadd.f32 %v1581, %v1717
    %v1719 = vpop.f32.mrb[0].mxu0
    %1720 = vmatprep.mubr.bf16.mxu0 0
    %1721 = vmatmul.mubr.bf16.gmra.mrb[0].mxu0 %v1551
    %v1722 = vpop.f32.mrb[0].mxu0
    %v1723 = vadd.f32 %v1582, %v1722
    %v1724 = vpop.f32.mrb[0].mxu0
    %v1725 = vpop.f32.mrb[0].mxu0
    %v1726 = vadd.f32 %v1583, %v1725
    %v1727 = vpop.f32.mrb[0].mxu0
    %1728 = vdwg.mxu0
    %v1729 = vmax.f32 %v1667, 0.0
    %v1730 = vmax.f32 %v1670, 0.0
    %v1731 = vmax.f32 %v1675, 0.0
    %v1732 = vmax.f32 %v1678, 0.0
    %v1733 = vmax.f32 %v1683, 0.0
    %v1734 = vmax.f32 %v1686, 0.0
    %v1735 = vmax.f32 %v1691, 0.0
    %v1736 = vmax.f32 %v1694, 0.0
    %v1737 = vmax.f32 %v1699, 0.0
    %v1738 = vmax.f32 %v1702, 0.0
    %v1739 = vmax.f32 %v1707, 0.0
    %v1740 = vmax.f32 %v1710, 0.0
    %v1741 = vmax.f32 %v1715, 0.0
    %v1742 = vmax.f32 %v1718, 0.0
    %v1743 = vmax.f32 %v1723, 0.0
    %v1744 = vmax.f32 %v1726, 0.0
    %1745 = vst [vmem:[#allocation2] sm:$0xff] %v1729
    %1746 = vst [vmem:[#allocation2 + $0x8] sm:$0xff] %v1730
    %1747 = vst [vmem:[#allocation2 + $0x10] sm:$0xff] %v1731
    %1748 = vst [vmem:[#allocation2 + $0x18] sm:$0xff] %v1732
    %1749 = vst [vmem:[#allocation2 + $0x20] sm:$0xff] %v1733
    %1750 = vst [vmem:[#allocation2 + $0x28] sm:$0xff] %v1734
    %1751 = vst [vmem:[#allocation2 + $0x30] sm:$0xff] %v1735
    %1752 = vst [vmem:[#allocation2 + $0x38] sm:$0xff] %v1736
    %1753 = vst [vmem:[#allocation2 + $0x40] sm:$0xff] %v1737
    %1754 = vst [vmem:[#allocation2 + $0x48] sm:$0xff] %v1738
    %1755 = vst [vmem:[#allocation2 + $0x50] sm:$0xff] %v1739
    %1756 = vst [vmem:[#allocation2 + $0x58] sm:$0xff] %v1740
    %1757 = vst [vmem:[#allocation2 + $0x60] sm:$0xff] %v1741
    %1758 = vst [vmem:[#allocation2 + $0x68] sm:$0xff] %v1742
    %1759 = vst [vmem:[#allocation2 + $0x70] sm:$0xff] %v1743
    %1760 = vst [vmem:[#allocation2 + $0x78] sm:$0xff] %v1744
    // Predicated region
    $region18: #{extra_bottleneck1_forward.3} parent=1 // pred_check
      _
    $region19: #{extra_bottleneck1_forward.3} parent=1 // pred_check_branch
      %1762 = sbr.rel (0) target = $region21
    $region20: #{extra_bottleneck1_forward.3} parent=1 // pred_region
      %s1764 = ssub.s32 2048, 2048
      %1765 = vsyncadd [#allocation3], %s1764
      %s1766 = sshll.u32 [#allocation2], 4
      %s1767 = int_to_ptr.vmem [resolvable:$true] %s1766
      %1772 = dma.vmem_to_hbm [thread:$0]  %s1767, 2048, %s4, [#allocation3], 128, 128, 8
    $region21: #{extra_bottleneck1_forward.3} parent=1 // pred_fallthru
      _
    // Predicated region
    $region22: #{extra_bottleneck1_forward.3} parent=1 // pred_check
      _
    $region23: #{extra_bottleneck1_forward.3} parent=1 // pred_check_branch
      %1774 = sbr.rel (0) target = $region25
    $region24: #{extra_bottleneck1_forward.3} parent=1 // pred_region
      %1775 = dma.done [#allocation3], 2048
    $region25: #{extra_bottleneck1_forward.3} parent=1 // pred_fallthru
      _
    %1776 = vsyncpa [#allocation3], 1

</llo_original>
